<compile_context>
chip_gen: v7x
topology: tpu7x:2x2x1
jax: 0.10.0
libtpu: 0.0.40
codegen_flags: <defaults>
</compile_context>

<pallas_src>
import math

import jax
import jax.numpy as jnp
from jax.experimental import pallas as pl
from jax.experimental.pallas import tpu as pltpu

# -------------------- small, fixed shapes --------------------
B, S, H = 2, 8, 32          # batch, seq len, hidden_size
NH, HD = 2, 16              # attention heads, head dim (NH*HD == H)
F = 64                      # FFN intermediate size
L = 16                      # latent_size  -> mean/logvar each [B, L]
VOCAB = 100
BS = B * S                  # flattened row dim


# -------------------- helpers used inside the kernel --------------------
def _layernorm(x, g, b, eps=1e-12):
    mu = jnp.mean(x, axis=-1, keepdims=True)
    var = jnp.mean((x - mu) ** 2, axis=-1, keepdims=True)
    return (x - mu) * jax.lax.rsqrt(var + eps) * g + b


def _gelu(x):
    # TODO(synk): HF BERT default is the exact erf GELU; tanh approximation is
    # kept here (backbone is synthetic, difference is ~1e-3).
    c = math.sqrt(2.0 / math.pi)
    return 0.5 * x * (1.0 + jnp.tanh(c * (x + 0.044715 * x * x * x)))


# -------------------- the fused Pallas kernel --------------------
def encoder_kernel(x_ref, bias_ref,
                   wqkv, bqkv, wo, bo,
                   g1, be1, w1, bf1, w2, bf2, g2, be2,
                   wp, bp, wml,
                   hid_ref, pool_ref, ml_ref):
    x = x_ref[...]                                   # (BS, H)
    bias = bias_ref[...]                             # (BS, BS) additive mask
    scale = 1.0 / math.sqrt(HD)

    # Fused QKV projection on the flattened activations (one matmul, 3H wide).
    qkv = jnp.dot(x, wqkv[...], preferred_element_type=jnp.float32) + bqkv[...]
    q = qkv[:, :H] * scale                           # fold 1/sqrt(HD) into q
    k = qkv[:, H:2 * H]
    v = qkv[:, 2 * H:]

    # Attention over all B*S rows at once per head.  The block-diagonal bias
    # (-1e9 for cross-batch and padded keys) makes this exactly equivalent to
    # per-batch attention.  The head-merge concat is avoided by accumulating
    # each head's slice of the output projection.
    wo_v = wo[...]                                   # (H, H)
    ctx_proj = None
    for h in range(NH):                              # static loop, NH == 2
        sl = slice(h * HD, (h + 1) * HD)
        sc = jax.lax.dot_general(q[:, sl], k[:, sl],
                                 (((1,), (1,)), ((), ())),
                                 preferred_element_type=jnp.float32) + bias
        sc = sc - jnp.max(sc, axis=-1, keepdims=True)
        p = jnp.exp(sc)
        p = p * pl.reciprocal(jnp.sum(p, axis=-1, keepdims=True), approx=True)
        ctx_h = jnp.dot(p, v[:, sl], preferred_element_type=jnp.float32)
        part = jnp.dot(ctx_h, wo_v[sl, :], preferred_element_type=jnp.float32)
        ctx_proj = part if ctx_proj is None else ctx_proj + part
    attn = ctx_proj + bo[...]

    h1 = _layernorm(x + attn, g1[...], be1[...])

    ff_in = jnp.dot(h1, w1[...], preferred_element_type=jnp.float32) + bf1[...]
    ff = jnp.dot(_gelu(ff_in), w2[...], preferred_element_type=jnp.float32) + bf2[...]
    h2 = _layernorm(h1 + ff, g2[...], be2[...])

    hid_ref[...] = h2                                # outputs.last_hidden_state (flat)

    # BERT-style pooler + mean/logvar projection, batched over B.
    cls = jnp.concatenate([h2[b * S:b * S + 1, :] for b in range(B)], axis=0)  # (B, H)
    pooled = jnp.tanh(
        jnp.dot(cls, wp[...], preferred_element_type=jnp.float32) + bp[...])
    ml = jnp.dot(pooled, wml[...], preferred_element_type=jnp.float32)         # (B, 2L)

    pool_ref[...] = pooled
    ml_ref[...] = ml                                 # [mean | logvar] packed


# -------------------- parameter init (deterministic, synthetic) --------------------
def init_params(key):
    # TODO(synk): real pretrained AutoModel/AutoTokenizer weights cannot be
    # reproduced in-script; a deterministic synthetic backbone is used instead.
    ks = jax.random.split(key, 12)
    n = lambda k, shp: (jax.random.normal(k, shp, jnp.float32) * 0.02)
    p = {
        "tok_emb": n(ks[0], (VOCAB, H)),
        "pos_emb": n(ks[1], (S, H)),
        "emb_g": jnp.ones((H,), jnp.float32),
        "emb_b": jnp.zeros((H,), jnp.float32),
        "wqkv": n(ks[2], (H, 3 * H)), "bqkv": jnp.zeros((1, 3 * H), jnp.float32),
        "wo": n(ks[3], (H, H)), "bo": jnp.zeros((1, H), jnp.float32),
        "g1": jnp.ones((1, H), jnp.float32), "be1": jnp.zeros((1, H), jnp.float32),
        "w1": n(ks[4], (H, F)), "bf1": jnp.zeros((1, F), jnp.float32),
        "w2": n(ks[5], (F, H)), "bf2": jnp.zeros((1, H), jnp.float32),
        "g2": jnp.ones((1, H), jnp.float32), "be2": jnp.zeros((1, H), jnp.float32),
        "wp": n(ks[6], (H, H)), "bp": jnp.zeros((1, H), jnp.float32),
        "wml": n(ks[7], (H, 2 * L)),
    }
    return p


# -------------------- wrapper (glue in plain JAX, compute in Pallas) --------------------
def encoder_forward(input_ids, attention_mask, params):
    # Embedding lookup + embedding layernorm = glue (gather), done in plain JAX.
    x = params["tok_emb"][input_ids] + params["pos_emb"][None, :, :]        # (B, S, H)
    mu = jnp.mean(x, axis=-1, keepdims=True)
    var = jnp.mean((x - mu) ** 2, axis=-1, keepdims=True)
    x = (x - mu) * jax.lax.rsqrt(var + 1e-12) * params["emb_g"] + params["emb_b"]
    x_flat = x.reshape(BS, H).astype(jnp.float32)

    # Block-diagonal additive attention mask over the flattened row dim:
    # key j is visible to query i iff same batch element AND not a pad token.
    mask = attention_mask.reshape(BS).astype(jnp.float32)                   # (BS,)
    batch_ids = jnp.repeat(jnp.arange(B), S)
    same_batch = batch_ids[:, None] == batch_ids[None, :]
    valid_key = (mask > 0.5)[None, :]
    bias = jnp.where(same_batch & valid_key, 0.0, -1e9).astype(jnp.float32)  # (BS, BS)

    weights = [params[k] for k in
               ("wqkv", "bqkv", "wo", "bo",
                "g1", "be1", "w1", "bf1", "w2", "bf2", "g2", "be2",
                "wp", "bp", "wml")]

    vmem = pl.BlockSpec(memory_space=pltpu.MemorySpace.VMEM)
    out_shape = (
        jax.ShapeDtypeStruct((BS, H), jnp.float32),      # last_hidden_state (flat)
        jax.ShapeDtypeStruct((B, H), jnp.float32),       # pooler_output
        jax.ShapeDtypeStruct((B, 2 * L), jnp.float32),   # [mean | logvar]
    )
    hid, pooled, ml = pl.pallas_call(
        encoder_kernel,
        out_shape=out_shape,
        in_specs=[vmem] * (2 + len(weights)),
        out_specs=(vmem, vmem, vmem),
    )(x_flat, bias, *weights)

    mean, logvar = ml[:, :L], ml[:, L:]
    outputs = {"last_hidden_state": hid.reshape(B, S, H), "pooler_output": pooled}
    # Mirror the PyTorch return signature: (mean, logvar, outputs)
    return mean, logvar, outputs


if __name__ == "__main__":
    key = jax.random.PRNGKey(0)
    k_param, k_ids = jax.random.split(key)
    params = init_params(k_param)

    input_ids = jax.random.randint(k_ids, (B, S), 0, VOCAB, dtype=jnp.int32)
    attention_mask = jnp.ones((B, S), jnp.int32).at[1, 6:].set(0)  # pad tail of batch 1

    mean, logvar, outputs = encoder_forward(input_ids, attention_mask, params)
    jax.block_until_ready((mean, logvar, outputs["last_hidden_state"],
                           outputs["pooler_output"]))

    assert mean.shape == (B, L) and logvar.shape == (B, L)
    assert outputs["last_hidden_state"].shape == (B, S, H)
    assert outputs["pooler_output"].shape == (B, H)
    print("KERNEL_OK")
</pallas_src>

<mosaic_0001>
module attributes {stable_mosaic.version = 11 : i64} {
  func.func @encoder_kernel(%arg0: memref<16x32xf32, #tpu.memory_space<vmem>>, %arg1: memref<16x16xf32, #tpu.memory_space<vmem>>, %arg2: memref<32x96xf32, #tpu.memory_space<vmem>>, %arg3: memref<1x96xf32, #tpu.memory_space<vmem>>, %arg4: memref<32x32xf32, #tpu.memory_space<vmem>>, %arg5: memref<1x32xf32, #tpu.memory_space<vmem>>, %arg6: memref<1x32xf32, #tpu.memory_space<vmem>>, %arg7: memref<1x32xf32, #tpu.memory_space<vmem>>, %arg8: memref<32x64xf32, #tpu.memory_space<vmem>>, %arg9: memref<1x64xf32, #tpu.memory_space<vmem>>, %arg10: memref<64x32xf32, #tpu.memory_space<vmem>>, %arg11: memref<1x32xf32, #tpu.memory_space<vmem>>, %arg12: memref<1x32xf32, #tpu.memory_space<vmem>>, %arg13: memref<1x32xf32, #tpu.memory_space<vmem>>, %arg14: memref<32x32xf32, #tpu.memory_space<vmem>>, %arg15: memref<1x32xf32, #tpu.memory_space<vmem>>, %arg16: memref<32x32xf32, #tpu.memory_space<vmem>>, %arg17: memref<16x32xf32, #tpu.memory_space<vmem>>, %arg18: memref<2x32xf32, #tpu.memory_space<vmem>>, %arg19: memref<2x32xf32, #tpu.memory_space<vmem>>) attributes {dimension_semantics = [], scalar_prefetch = 0 : i64, scratch_operands = 0 : i64, tpu.core_type = #tpu.core_type<tc>} {
    %c0 = arith.constant 0 : index
    %c0_0 = arith.constant 0 : index
    %0 = vector.load %arg0[%c0, %c0_0] : memref<16x32xf32, #tpu.memory_space<vmem>>, vector<16x32xf32>
    %c0_1 = arith.constant 0 : index
    %c0_2 = arith.constant 0 : index
    %1 = vector.load %arg1[%c0_1, %c0_2] : memref<16x16xf32, #tpu.memory_space<vmem>>, vector<16x16xf32>
    %c0_3 = arith.constant 0 : index
    %c0_4 = arith.constant 0 : index
    %2 = vector.load %arg2[%c0_3, %c0_4] : memref<32x96xf32, #tpu.memory_space<vmem>>, vector<32x96xf32>
    %cst = arith.constant dense<0.000000e+00> : vector<16x96xf32>
    %3 = tpu.matmul %0, %2, %cst {dimension_numbers = #tpu.dot_dimension_numbers<[1], [0], [0], [1], [0, 0, 1, 1], [], []>} : vector<16x32xf32>, vector<32x96xf32>, vector<16x96xf32> -> vector<16x96xf32>
    %c0_5 = arith.constant 0 : index
    %c0_6 = arith.constant 0 : index
    %4 = vector.load %arg3[%c0_5, %c0_6] : memref<1x96xf32, #tpu.memory_space<vmem>>, vector<1x96xf32>
    %5 = vector.broadcast %4 : vector<1x96xf32> to vector<16x96xf32>
    %6 = arith.addf %3, %5 : vector<16x96xf32>
    %7 = vector.extract_strided_slice %6 {offsets = [0, 0], sizes = [16, 32], strides = [1, 1]} : vector<16x96xf32> to vector<16x32xf32>
    %cst_7 = arith.constant 2.500000e-01 : f32
    %8 = vector.broadcast %cst_7 : f32 to vector<16x32xf32>
    %9 = arith.mulf %7, %8 : vector<16x32xf32>
    %10 = vector.extract_strided_slice %6 {offsets = [0, 32], sizes = [16, 32], strides = [1, 1]} : vector<16x96xf32> to vector<16x32xf32>
    %11 = vector.extract_strided_slice %6 {offsets = [0, 64], sizes = [16, 32], strides = [1, 1]} : vector<16x96xf32> to vector<16x32xf32>
    %c0_8 = arith.constant 0 : index
    %c0_9 = arith.constant 0 : index
    %12 = vector.load %arg4[%c0_8, %c0_9] : memref<32x32xf32, #tpu.memory_space<vmem>>, vector<32x32xf32>
    %13 = vector.extract_strided_slice %9 {offsets = [0, 0], sizes = [16, 16], strides = [1, 1]} : vector<16x32xf32> to vector<16x16xf32>
    %14 = vector.extract_strided_slice %10 {offsets = [0, 0], sizes = [16, 16], strides = [1, 1]} : vector<16x32xf32> to vector<16x16xf32>
    %cst_10 = arith.constant dense<0.000000e+00> : vector<16x16xf32>
    %15 = tpu.matmul %13, %14, %cst_10 {dimension_numbers = #tpu.dot_dimension_numbers<[1], [1], [0], [0], [0, 0, 1, 0], [], []>} : vector<16x16xf32>, vector<16x16xf32>, vector<16x16xf32> -> vector<16x16xf32>
    %16 = arith.addf %15, %1 : vector<16x16xf32>
    %cst_11 = arith.constant dense<0xFF800000> : vector<16xf32>
    %17 = vector.multi_reduction <maximumf>, %16, %cst_11 [1] : vector<16x16xf32> to vector<16xf32>
    %18 = vector.shape_cast %17 : vector<16xf32> to vector<16x1xf32>
    %19 = vector.broadcast %18 : vector<16x1xf32> to vector<16x16xf32>
    %20 = arith.subf %16, %19 : vector<16x16xf32>
    %21 = math.exp %20 : vector<16x16xf32>
    %cst_12 = arith.constant dense<0.000000e+00> : vector<16xf32>
    %22 = vector.multi_reduction <add>, %21, %cst_12 [1] : vector<16x16xf32> to vector<16xf32>
    %23 = vector.shape_cast %22 : vector<16xf32> to vector<16x1xf32>
    %24 = tpu.reciprocal %23 {approx = true} : vector<16x1xf32> -> vector<16x1xf32>
    %25 = vector.broadcast %24 : vector<16x1xf32> to vector<16x16xf32>
    %26 = arith.mulf %21, %25 : vector<16x16xf32>
    %27 = vector.extract_strided_slice %11 {offsets = [0, 0], sizes = [16, 16], strides = [1, 1]} : vector<16x32xf32> to vector<16x16xf32>
    %cst_13 = arith.constant dense<0.000000e+00> : vector<16x16xf32>
    %28 = tpu.matmul %26, %27, %cst_13 {dimension_numbers = #tpu.dot_dimension_numbers<[1], [0], [0], [1], [0, 0, 1, 1], [], []>} : vector<16x16xf32>, vector<16x16xf32>, vector<16x16xf32> -> vector<16x16xf32>
    %29 = vector.extract_strided_slice %12 {offsets = [0, 0], sizes = [16, 32], strides = [1, 1]} : vector<32x32xf32> to vector<16x32xf32>
    %cst_14 = arith.constant dense<0.000000e+00> : vector<16x32xf32>
    %30 = tpu.matmul %28, %29, %cst_14 {dimension_numbers = #tpu.dot_dimension_numbers<[1], [0], [0], [1], [0, 0, 1, 1], [], []>} : vector<16x16xf32>, vector<16x32xf32>, vector<16x32xf32> -> vector<16x32xf32>
    %31 = vector.extract_strided_slice %9 {offsets = [0, 16], sizes = [16, 16], strides = [1, 1]} : vector<16x32xf32> to vector<16x16xf32>
    %32 = vector.extract_strided_slice %10 {offsets = [0, 16], sizes = [16, 16], strides = [1, 1]} : vector<16x32xf32> to vector<16x16xf32>
    %cst_15 = arith.constant dense<0.000000e+00> : vector<16x16xf32>
    %33 = tpu.matmul %31, %32, %cst_15 {dimension_numbers = #tpu.dot_dimension_numbers<[1], [1], [0], [0], [0, 0, 1, 0], [], []>} : vector<16x16xf32>, vector<16x16xf32>, vector<16x16xf32> -> vector<16x16xf32>
    %34 = arith.addf %33, %1 : vector<16x16xf32>
    %cst_16 = arith.constant dense<0xFF800000> : vector<16xf32>
    %35 = vector.multi_reduction <maximumf>, %34, %cst_16 [1] : vector<16x16xf32> to vector<16xf32>
    %36 = vector.shape_cast %35 : vector<16xf32> to vector<16x1xf32>
    %37 = vector.broadcast %36 : vector<16x1xf32> to vector<16x16xf32>
    %38 = arith.subf %34, %37 : vector<16x16xf32>
    %39 = math.exp %38 : vector<16x16xf32>
    %cst_17 = arith.constant dense<0.000000e+00> : vector<16xf32>
    %40 = vector.multi_reduction <add>, %39, %cst_17 [1] : vector<16x16xf32> to vector<16xf32>
    %41 = vector.shape_cast %40 : vector<16xf32> to vector<16x1xf32>
    %42 = tpu.reciprocal %41 {approx = true} : vector<16x1xf32> -> vector<16x1xf32>
    %43 = vector.broadcast %42 : vector<16x1xf32> to vector<16x16xf32>
    %44 = arith.mulf %39, %43 : vector<16x16xf32>
    %45 = vector.extract_strided_slice %11 {offsets = [0, 16], sizes = [16, 16], strides = [1, 1]} : vector<16x32xf32> to vector<16x16xf32>
    %cst_18 = arith.constant dense<0.000000e+00> : vector<16x16xf32>
    %46 = tpu.matmul %44, %45, %cst_18 {dimension_numbers = #tpu.dot_dimension_numbers<[1], [0], [0], [1], [0, 0, 1, 1], [], []>} : vector<16x16xf32>, vector<16x16xf32>, vector<16x16xf32> -> vector<16x16xf32>
    %47 = vector.extract_strided_slice %12 {offsets = [16, 0], sizes = [16, 32], strides = [1, 1]} : vector<32x32xf32> to vector<16x32xf32>
    %cst_19 = arith.constant dense<0.000000e+00> : vector<16x32xf32>
    %48 = tpu.matmul %46, %47, %cst_19 {dimension_numbers = #tpu.dot_dimension_numbers<[1], [0], [0], [1], [0, 0, 1, 1], [], []>} : vector<16x16xf32>, vector<16x32xf32>, vector<16x32xf32> -> vector<16x32xf32>
    %49 = arith.addf %30, %48 : vector<16x32xf32>
    %c0_20 = arith.constant 0 : index
    %c0_21 = arith.constant 0 : index
    %50 = vector.load %arg5[%c0_20, %c0_21] : memref<1x32xf32, #tpu.memory_space<vmem>>, vector<1x32xf32>
    %51 = vector.broadcast %50 : vector<1x32xf32> to vector<16x32xf32>
    %52 = arith.addf %49, %51 : vector<16x32xf32>
    %53 = arith.addf %0, %52 : vector<16x32xf32>
    %c0_22 = arith.constant 0 : index
    %c0_23 = arith.constant 0 : index
    %54 = vector.load %arg6[%c0_22, %c0_23] : memref<1x32xf32, #tpu.memory_space<vmem>>, vector<1x32xf32>
    %c0_24 = arith.constant 0 : index
    %c0_25 = arith.constant 0 : index
    %55 = vector.load %arg7[%c0_24, %c0_25] : memref<1x32xf32, #tpu.memory_space<vmem>>, vector<1x32xf32>
    %cst_26 = arith.constant dense<0.000000e+00> : vector<16xf32>
    %56 = vector.multi_reduction <add>, %53, %cst_26 [1] : vector<16x32xf32> to vector<16xf32>
    %57 = vector.shape_cast %56 : vector<16xf32> to vector<16x1xf32>
    %cst_27 = arith.constant 3.200000e+01 : f32
    %58 = vector.broadcast %cst_27 : f32 to vector<16x1xf32>
    %59 = arith.divf %57, %58 : vector<16x1xf32>
    %60 = vector.broadcast %59 : vector<16x1xf32> to vector<16x32xf32>
    %61 = arith.subf %53, %60 : vector<16x32xf32>
    %62 = arith.mulf %61, %61 : vector<16x32xf32>
    %cst_28 = arith.constant dense<0.000000e+00> : vector<16xf32>
    %63 = vector.multi_reduction <add>, %62, %cst_28 [1] : vector<16x32xf32> to vector<16xf32>
    %64 = vector.shape_cast %63 : vector<16xf32> to vector<16x1xf32>
    %cst_29 = arith.constant 3.200000e+01 : f32
    %65 = vector.broadcast %cst_29 : f32 to vector<16x1xf32>
    %66 = arith.divf %64, %65 : vector<16x1xf32>
    %67 = vector.broadcast %59 : vector<16x1xf32> to vector<16x32xf32>
    %68 = arith.subf %53, %67 : vector<16x32xf32>
    %cst_30 = arith.constant 9.99999996E-13 : f32
    %69 = vector.broadcast %cst_30 : f32 to vector<16x1xf32>
    %70 = arith.addf %66, %69 : vector<16x1xf32>
    %71 = math.rsqrt %70 : vector<16x1xf32>
    %72 = vector.broadcast %71 : vector<16x1xf32> to vector<16x32xf32>
    %73 = arith.mulf %68, %72 : vector<16x32xf32>
    %74 = vector.broadcast %54 : vector<1x32xf32> to vector<16x32xf32>
    %75 = arith.mulf %73, %74 : vector<16x32xf32>
    %76 = vector.broadcast %55 : vector<1x32xf32> to vector<16x32xf32>
    %77 = arith.addf %75, %76 : vector<16x32xf32>
    %c0_31 = arith.constant 0 : index
    %c0_32 = arith.constant 0 : index
    %78 = vector.load %arg8[%c0_31, %c0_32] : memref<32x64xf32, #tpu.memory_space<vmem>>, vector<32x64xf32>
    %cst_33 = arith.constant dense<0.000000e+00> : vector<16x64xf32>
    %79 = tpu.matmul %77, %78, %cst_33 {dimension_numbers = #tpu.dot_dimension_numbers<[1], [0], [0], [1], [0, 0, 1, 1], [], []>} : vector<16x32xf32>, vector<32x64xf32>, vector<16x64xf32> -> vector<16x64xf32>
    %c0_34 = arith.constant 0 : index
    %c0_35 = arith.constant 0 : index
    %80 = vector.load %arg9[%c0_34, %c0_35] : memref<1x64xf32, #tpu.memory_space<vmem>>, vector<1x64xf32>
    %81 = vector.broadcast %80 : vector<1x64xf32> to vector<16x64xf32>
    %82 = arith.addf %79, %81 : vector<16x64xf32>
    %cst_36 = arith.constant 5.000000e-01 : f32
    %83 = vector.broadcast %cst_36 : f32 to vector<16x64xf32>
    %84 = arith.mulf %83, %82 : vector<16x64xf32>
    %cst_37 = arith.constant 4.471500e-02 : f32
    %85 = vector.broadcast %cst_37 : f32 to vector<16x64xf32>
    %86 = arith.mulf %85, %82 : vector<16x64xf32>
    %87 = arith.mulf %86, %82 : vector<16x64xf32>
    %88 = arith.mulf %87, %82 : vector<16x64xf32>
    %89 = arith.addf %82, %88 : vector<16x64xf32>
    %cst_38 = arith.constant 0.797884583 : f32
    %90 = vector.broadcast %cst_38 : f32 to vector<16x64xf32>
    %91 = arith.mulf %90, %89 : vector<16x64xf32>
    %92 = math.tanh %91 : vector<16x64xf32>
    %cst_39 = arith.constant 1.000000e+00 : f32
    %93 = vector.broadcast %cst_39 : f32 to vector<16x64xf32>
    %94 = arith.addf %93, %92 : vector<16x64xf32>
    %95 = arith.mulf %84, %94 : vector<16x64xf32>
    %c0_40 = arith.constant 0 : index
    %c0_41 = arith.constant 0 : index
    %96 = vector.load %arg10[%c0_40, %c0_41] : memref<64x32xf32, #tpu.memory_space<vmem>>, vector<64x32xf32>
    %cst_42 = arith.constant dense<0.000000e+00> : vector<16x32xf32>
    %97 = tpu.matmul %95, %96, %cst_42 {dimension_numbers = #tpu.dot_dimension_numbers<[1], [0], [0], [1], [0, 0, 1, 1], [], []>} : vector<16x64xf32>, vector<64x32xf32>, vector<16x32xf32> -> vector<16x32xf32>
    %c0_43 = arith.constant 0 : index
    %c0_44 = arith.constant 0 : index
    %98 = vector.load %arg11[%c0_43, %c0_44] : memref<1x32xf32, #tpu.memory_space<vmem>>, vector<1x32xf32>
    %99 = vector.broadcast %98 : vector<1x32xf32> to vector<16x32xf32>
    %100 = arith.addf %97, %99 : vector<16x32xf32>
    %101 = arith.addf %77, %100 : vector<16x32xf32>
    %c0_45 = arith.constant 0 : index
    %c0_46 = arith.constant 0 : index
    %102 = vector.load %arg12[%c0_45, %c0_46] : memref<1x32xf32, #tpu.memory_space<vmem>>, vector<1x32xf32>
    %c0_47 = arith.constant 0 : index
    %c0_48 = arith.constant 0 : index
    %103 = vector.load %arg13[%c0_47, %c0_48] : memref<1x32xf32, #tpu.memory_space<vmem>>, vector<1x32xf32>
    %cst_49 = arith.constant dense<0.000000e+00> : vector<16xf32>
    %104 = vector.multi_reduction <add>, %101, %cst_49 [1] : vector<16x32xf32> to vector<16xf32>
    %105 = vector.shape_cast %104 : vector<16xf32> to vector<16x1xf32>
    %cst_50 = arith.constant 3.200000e+01 : f32
    %106 = vector.broadcast %cst_50 : f32 to vector<16x1xf32>
    %107 = arith.divf %105, %106 : vector<16x1xf32>
    %108 = vector.broadcast %107 : vector<16x1xf32> to vector<16x32xf32>
    %109 = arith.subf %101, %108 : vector<16x32xf32>
    %110 = arith.mulf %109, %109 : vector<16x32xf32>
    %cst_51 = arith.constant dense<0.000000e+00> : vector<16xf32>
    %111 = vector.multi_reduction <add>, %110, %cst_51 [1] : vector<16x32xf32> to vector<16xf32>
    %112 = vector.shape_cast %111 : vector<16xf32> to vector<16x1xf32>
    %cst_52 = arith.constant 3.200000e+01 : f32
    %113 = vector.broadcast %cst_52 : f32 to vector<16x1xf32>
    %114 = arith.divf %112, %113 : vector<16x1xf32>
    %115 = vector.broadcast %107 : vector<16x1xf32> to vector<16x32xf32>
    %116 = arith.subf %101, %115 : vector<16x32xf32>
    %cst_53 = arith.constant 9.99999996E-13 : f32
    %117 = vector.broadcast %cst_53 : f32 to vector<16x1xf32>
    %118 = arith.addf %114, %117 : vector<16x1xf32>
    %119 = math.rsqrt %118 : vector<16x1xf32>
    %120 = vector.broadcast %119 : vector<16x1xf32> to vector<16x32xf32>
    %121 = arith.mulf %116, %120 : vector<16x32xf32>
    %122 = vector.broadcast %102 : vector<1x32xf32> to vector<16x32xf32>
    %123 = arith.mulf %121, %122 : vector<16x32xf32>
    %124 = vector.broadcast %103 : vector<1x32xf32> to vector<16x32xf32>
    %125 = arith.addf %123, %124 : vector<16x32xf32>
    %c0_54 = arith.constant 0 : index
    %c0_55 = arith.constant 0 : index
    %126 = vector.load %arg17[%c0_54, %c0_55] : memref<16x32xf32, #tpu.memory_space<vmem>>, vector<16x32xf32>
    tpu.vector_store %arg17[%c0_54, %c0_55], %125 {strides = array<i32>} : memref<16x32xf32, #tpu.memory_space<vmem>>, vector<16x32xf32>,
    %127 = vector.extract_strided_slice %125 {offsets = [0, 0], sizes = [1, 32], strides = [1, 1]} : vector<16x32xf32> to vector<1x32xf32>
    %128 = vector.extract_strided_slice %125 {offsets = [8, 0], sizes = [1, 32], strides = [1, 1]} : vector<16x32xf32> to vector<1x32xf32>
    %129 = tpu.concatenate %127, %128 in 0 : vector<1x32xf32>, vector<1x32xf32> -> vector<2x32xf32>
    %c0_56 = arith.constant 0 : index
    %c0_57 = arith.constant 0 : index
    %130 = vector.load %arg14[%c0_56, %c0_57] : memref<32x32xf32, #tpu.memory_space<vmem>>, vector<32x32xf32>
    %cst_58 = arith.constant dense<0.000000e+00> : vector<2x32xf32>
    %131 = tpu.matmul %129, %130, %cst_58 {dimension_numbers = #tpu.dot_dimension_numbers<[1], [0], [0], [1], [0, 0, 1, 1], [], []>} : vector<2x32xf32>, vector<32x32xf32>, vector<2x32xf32> -> vector<2x32xf32>
    %c0_59 = arith.constant 0 : index
    %c0_60 = arith.constant 0 : index
    %132 = vector.load %arg15[%c0_59, %c0_60] : memref<1x32xf32, #tpu.memory_space<vmem>>, vector<1x32xf32>
    %133 = vector.broadcast %132 : vector<1x32xf32> to vector<2x32xf32>
    %134 = arith.addf %131, %133 : vector<2x32xf32>
    %135 = math.tanh %134 : vector<2x32xf32>
    %c0_61 = arith.constant 0 : index
    %c0_62 = arith.constant 0 : index
    %136 = vector.load %arg16[%c0_61, %c0_62] : memref<32x32xf32, #tpu.memory_space<vmem>>, vector<32x32xf32>
    %cst_63 = arith.constant dense<0.000000e+00> : vector<2x32xf32>
    %137 = tpu.matmul %135, %136, %cst_63 {dimension_numbers = #tpu.dot_dimension_numbers<[1], [0], [0], [1], [0, 0, 1, 1], [], []>} : vector<2x32xf32>, vector<32x32xf32>, vector<2x32xf32> -> vector<2x32xf32>
    %c0_64 = arith.constant 0 : index
    %c0_65 = arith.constant 0 : index
    %138 = vector.load %arg18[%c0_64, %c0_65] : memref<2x32xf32, #tpu.memory_space<vmem>>, vector<2x32xf32>
    tpu.vector_store %arg18[%c0_64, %c0_65], %135 {strides = array<i32>} : memref<2x32xf32, #tpu.memory_space<vmem>>, vector<2x32xf32>,
    %c0_66 = arith.constant 0 : index
    %c0_67 = arith.constant 0 : index
    %139 = vector.load %arg19[%c0_66, %c0_67] : memref<2x32xf32, #tpu.memory_space<vmem>>, vector<2x32xf32>
    tpu.vector_store %arg19[%c0_66, %c0_67], %137 {strides = array<i32>} : memref<2x32xf32, #tpu.memory_space<vmem>>, vector<2x32xf32>,
    return
  }
}

</mosaic_0001>

<llo_original>
// kernel: tpu_custom_call.1
$region0: #{tpu_custom_call.1}
  #allocation0 [shape = 'u32[]', space=smem, size = 0x4, offset = 0x4, fixed_abs, tag = 'smem constant byte address 0x4 - core index']
  #allocation1 [shape = 'u32[144,128]{1,0:T(1,128)}', space=vmem, size = 0x12000, scoped, tag = 'internal scratch']
  %s0 = inlined_call_operand.hbm [shape: f32[16,32], index: 0, kind: input, shape index: {}]
  %s1 = inlined_call_operand.hbm [shape: f32[16,16], index: 1, kind: input, shape index: {}]
  %s2 = inlined_call_operand.vmem [shape: f32[32,96], index: 2, kind: input, shape index: {}]
  %s3 = inlined_call_operand.vmem [shape: f32[1,96], index: 3, kind: input, shape index: {}]
  %s4 = inlined_call_operand.vmem [shape: f32[32,32], index: 4, kind: input, shape index: {}]
  %s5 = inlined_call_operand.vmem [shape: f32[1,32], index: 5, kind: input, shape index: {}]
  %s6 = inlined_call_operand.vmem [shape: f32[1,32], index: 6, kind: input, shape index: {}]
  %s7 = inlined_call_operand.vmem [shape: f32[1,32], index: 7, kind: input, shape index: {}]
  %s8 = inlined_call_operand.vmem [shape: f32[32,64], index: 8, kind: input, shape index: {}]
  %s9 = inlined_call_operand.vmem [shape: f32[1,64], index: 9, kind: input, shape index: {}]
  %s10 = inlined_call_operand.vmem [shape: f32[64,32], index: 10, kind: input, shape index: {}]
  %s11 = inlined_call_operand.vmem [shape: f32[1,32], index: 11, kind: input, shape index: {}]
  %s12 = inlined_call_operand.vmem [shape: f32[1,32], index: 12, kind: input, shape index: {}]
  %s13 = inlined_call_operand.vmem [shape: f32[1,32], index: 13, kind: input, shape index: {}]
  %s14 = inlined_call_operand.hbm [shape: f32[32,32], index: 14, kind: input, shape index: {}]
  %s15 = inlined_call_operand.vmem [shape: f32[1,32], index: 15, kind: input, shape index: {}]
  %s16 = inlined_call_operand.hbm [shape: f32[32,32], index: 16, kind: input, shape index: {}]
  %s17 = inlined_call_operand.hbm [shape: f32[16,32], index: 17, kind: output, shape index: {0}]
  %s18 = inlined_call_operand.hbm [shape: f32[2,32], index: 18, kind: output, shape index: {1}]
  %s19 = inlined_call_operand.hbm [shape: f32[2,32], index: 19, kind: output, shape index: {2}]
  %20 = xla_tuple %s17, %s18, %s19
  %s21 = sld [smem:[#allocation0]]
  $region110: #{tpu_custom_call.1} parent=0
    _
  %s23 = ssub.s32 1, %s21
  %s24 = scalar_select 0, %s23, %s21
  $region1: #{tpu_custom_call.1} parent=0
    #allocation2 [shape = 'u8[8192]{0}', space=vmem, size = 0x2000, scoped, tag = 'input window, operand 0, single buffered']
    #allocation3 [shape = 's32[1]{0}', space=sflag, size = 0x4, scoped, tag = 'scoped memory for tpu_custom_call.1']
    #allocation4 [shape = 's32[1]{0}', space=sflag, size = 0x4, scoped, tag = 'scoped memory for tpu_custom_call.1']
    #allocation5 [shape = 'u8[8192]{0}', space=vmem, size = 0x2000, scoped, tag = 'input window, operand 1, single buffered']
    #allocation6 [shape = 's32[1]{0}', space=sflag, size = 0x4, scoped, tag = 'scoped memory for tpu_custom_call.1']
    #allocation7 [shape = 'u8[16384]{0}', space=vmem, size = 0x4000, scoped, tag = 'input window, operand 14, single buffered']
    #allocation8 [shape = 'u8[16384]{0}', space=vmem, size = 0x4000, scoped, tag = 'input window, operand 16, single buffered']
    #allocation9 [shape = 's32[1]{0}', space=sflag, size = 0x4, scoped, tag = 'scoped memory for tpu_custom_call.1']
    #allocation10 [shape = 'u8[8192]{0}', space=vmem, size = 0x2000, scoped, tag = 'output window, operand 0, single buffered']
    #allocation11 [shape = 'u8[1024]{0}', space=vmem, size = 0x400, scoped, tag = 'output window, operand 1, single buffered']
    #allocation12 [shape = 's32[1]{0}', space=sflag, size = 0x4, scoped, tag = 'scoped memory for tpu_custom_call.1']
    #allocation13 [shape = 'u8[1024]{0}', space=vmem, size = 0x400, scoped, tag = 'output window, operand 2, single buffered']
    %25 = vsyncpa [#allocation3], 0
    %26 = vsyncpa [#allocation6], 0
    %27 = vsyncpa [#allocation9], 0
    %28 = vsyncpa [#allocation4], 0
    %29 = vsyncpa [#allocation12], 0
    // Predicated region
    $region2: #{tpu_custom_call.1} parent=1 // pred_check
      _
    $region3: #{tpu_custom_call.1} parent=1 // pred_check_branch
      %31 = sbr.rel (0) target = $region5
    $region4: #{tpu_custom_call.1} parent=1 // pred_region
      %s33 = ssub.s32 256, 256
      %34 = vsyncadd [#allocation3], %s33
      %s35 = sshll.u32 [#allocation2], 4
      %s36 = int_to_ptr.vmem [resolvable:$true] %s35
      %41 = dma.hbm_to_vmem [thread:$0]  %s0, 256, %s36, [#allocation3], 128, 128, 8
    $region5: #{tpu_custom_call.1} parent=1 // pred_fallthru
      _
    // Predicated region
    $region6: #{tpu_custom_call.1} parent=1 // pred_check
      _
    $region7: #{tpu_custom_call.1} parent=1 // pred_check_branch
      %43 = sbr.rel (0) target = $region9
    $region8: #{tpu_custom_call.1} parent=1 // pred_region
      %s45 = ssub.s32 256, 256
      %46 = vsyncadd [#allocation6], %s45
      %s47 = sshll.u32 [#allocation5], 4
      %s48 = int_to_ptr.vmem [resolvable:$true] %s47
      %53 = dma.hbm_to_vmem [thread:$0]  %s1, 256, %s48, [#allocation6], 128, 128, 8
    $region9: #{tpu_custom_call.1} parent=1 // pred_fallthru
      _
    // Predicated region
    $region10: #{tpu_custom_call.1} parent=1 // pred_check
      _
    $region11: #{tpu_custom_call.1} parent=1 // pred_check_branch
      %55 = sbr.rel (0) target = $region13
    $region12: #{tpu_custom_call.1} parent=1 // pred_region
      _
    $region13: #{tpu_custom_call.1} parent=1 // pred_fallthru
      _
    // Predicated region
    $region14: #{tpu_custom_call.1} parent=1 // pred_check
      _
    $region15: #{tpu_custom_call.1} parent=1 // pred_check_branch
      %57 = sbr.rel (0) target = $region17
    $region16: #{tpu_custom_call.1} parent=1 // pred_region
      _
    $region17: #{tpu_custom_call.1} parent=1 // pred_fallthru
      _
    // Predicated region
    $region18: #{tpu_custom_call.1} parent=1 // pred_check
      _
    $region19: #{tpu_custom_call.1} parent=1 // pred_check_branch
      %59 = sbr.rel (0) target = $region21
    $region20: #{tpu_custom_call.1} parent=1 // pred_region
      _
    $region21: #{tpu_custom_call.1} parent=1 // pred_fallthru
      _
    // Predicated region
    $region22: #{tpu_custom_call.1} parent=1 // pred_check
      _
    $region23: #{tpu_custom_call.1} parent=1 // pred_check_branch
      %61 = sbr.rel (0) target = $region25
    $region24: #{tpu_custom_call.1} parent=1 // pred_region
      _
    $region25: #{tpu_custom_call.1} parent=1 // pred_fallthru
      _
    // Predicated region
    $region26: #{tpu_custom_call.1} parent=1 // pred_check
      _
    $region27: #{tpu_custom_call.1} parent=1 // pred_check_branch
      %63 = sbr.rel (0) target = $region29
    $region28: #{tpu_custom_call.1} parent=1 // pred_region
      _
    $region29: #{tpu_custom_call.1} parent=1 // pred_fallthru
      _
    // Predicated region
    $region30: #{tpu_custom_call.1} parent=1 // pred_check
      _
    $region31: #{tpu_custom_call.1} parent=1 // pred_check_branch
      %65 = sbr.rel (0) target = $region33
    $region32: #{tpu_custom_call.1} parent=1 // pred_region
      _
    $region33: #{tpu_custom_call.1} parent=1 // pred_fallthru
      _
    // Predicated region
    $region34: #{tpu_custom_call.1} parent=1 // pred_check
      _
    $region35: #{tpu_custom_call.1} parent=1 // pred_check_branch
      %67 = sbr.rel (0) target = $region37
    $region36: #{tpu_custom_call.1} parent=1 // pred_region
      _
    $region37: #{tpu_custom_call.1} parent=1 // pred_fallthru
      _
    // Predicated region
    $region38: #{tpu_custom_call.1} parent=1 // pred_check
      _
    $region39: #{tpu_custom_call.1} parent=1 // pred_check_branch
      %69 = sbr.rel (0) target = $region41
    $region40: #{tpu_custom_call.1} parent=1 // pred_region
      _
    $region41: #{tpu_custom_call.1} parent=1 // pred_fallthru
      _
    // Predicated region
    $region42: #{tpu_custom_call.1} parent=1 // pred_check
      _
    $region43: #{tpu_custom_call.1} parent=1 // pred_check_branch
      %71 = sbr.rel (0) target = $region45
    $region44: #{tpu_custom_call.1} parent=1 // pred_region
      _
    $region45: #{tpu_custom_call.1} parent=1 // pred_fallthru
      _
    // Predicated region
    $region46: #{tpu_custom_call.1} parent=1 // pred_check
      _
    $region47: #{tpu_custom_call.1} parent=1 // pred_check_branch
      %73 = sbr.rel (0) target = $region49
    $region48: #{tpu_custom_call.1} parent=1 // pred_region
      _
    $region49: #{tpu_custom_call.1} parent=1 // pred_fallthru
      _
    // Predicated region
    $region50: #{tpu_custom_call.1} parent=1 // pred_check
      _
    $region51: #{tpu_custom_call.1} parent=1 // pred_check_branch
      %75 = sbr.rel (0) target = $region53
    $region52: #{tpu_custom_call.1} parent=1 // pred_region
      _
    $region53: #{tpu_custom_call.1} parent=1 // pred_fallthru
      _
    // Predicated region
    $region54: #{tpu_custom_call.1} parent=1 // pred_check
      _
    $region55: #{tpu_custom_call.1} parent=1 // pred_check_branch
      %77 = sbr.rel (0) target = $region57
    $region56: #{tpu_custom_call.1} parent=1 // pred_region
      _
    $region57: #{tpu_custom_call.1} parent=1 // pred_fallthru
      _
    // Predicated region
    $region58: #{tpu_custom_call.1} parent=1 // pred_check
      _
    $region59: #{tpu_custom_call.1} parent=1 // pred_check_branch
      %79 = sbr.rel (0) target = $region61
    $region60: #{tpu_custom_call.1} parent=1 // pred_region
      %s81 = ssub.s32 512, 512
      %82 = vsyncadd [#allocation6], %s81
      %s83 = sshll.u32 [#allocation7], 4
      %s84 = int_to_ptr.vmem [resolvable:$true] %s83
      %89 = dma.hbm_to_vmem [thread:$0]  %s14, 512, %s84, [#allocation6], 128, 128, 8
    $region61: #{tpu_custom_call.1} parent=1 // pred_fallthru
      _
    // Predicated region
    $region62: #{tpu_custom_call.1} parent=1 // pred_check
      _
    $region63: #{tpu_custom_call.1} parent=1 // pred_check_branch
      %91 = sbr.rel (0) target = $region65
    $region64: #{tpu_custom_call.1} parent=1 // pred_region
      _
    $region65: #{tpu_custom_call.1} parent=1 // pred_fallthru
      _
    // Predicated region
    $region66: #{tpu_custom_call.1} parent=1 // pred_check
      _
    $region67: #{tpu_custom_call.1} parent=1 // pred_check_branch
      %93 = sbr.rel (0) target = $region69
    $region68: #{tpu_custom_call.1} parent=1 // pred_region
      %s95 = ssub.s32 512, 512
      %96 = vsyncadd [#allocation9], %s95
      %s97 = sshll.u32 [#allocation8], 4
      %s98 = int_to_ptr.vmem [resolvable:$true] %s97
      %103 = dma.hbm_to_vmem [thread:$0]  %s16, 512, %s98, [#allocation9], 128, 128, 8
    $region69: #{tpu_custom_call.1} parent=1 // pred_fallthru
      _
    // Predicated region
    $region70: #{tpu_custom_call.1} parent=1 // pred_check
      _
    $region71: #{tpu_custom_call.1} parent=1 // pred_check_branch
      %105 = sbr.rel (0) target = $region73
    $region72: #{tpu_custom_call.1} parent=1 // pred_region
      %106 = dma.done [#allocation3], 256
    $region73: #{tpu_custom_call.1} parent=1 // pred_fallthru
      _
    // Predicated region
    $region74: #{tpu_custom_call.1} parent=1 // pred_check
      _
    $region75: #{tpu_custom_call.1} parent=1 // pred_check_branch
      %108 = sbr.rel (0) target = $region77
    $region76: #{tpu_custom_call.1} parent=1 // pred_region
      %109 = dma.done [#allocation6], 256
    $region77: #{tpu_custom_call.1} parent=1 // pred_fallthru
      _
    // Predicated region
    $region78: #{tpu_custom_call.1} parent=1 // pred_check
      _
    $region79: #{tpu_custom_call.1} parent=1 // pred_check_branch
      %111 = sbr.rel (0) target = $region81
    $region80: #{tpu_custom_call.1} parent=1 // pred_region
      %112 = dma.done [#allocation6], 512
    $region81: #{tpu_custom_call.1} parent=1 // pred_fallthru
      _
    // Predicated region
    $region82: #{tpu_custom_call.1} parent=1 // pred_check
      _
    $region83: #{tpu_custom_call.1} parent=1 // pred_check_branch
      %114 = sbr.rel (0) target = $region85
    $region84: #{tpu_custom_call.1} parent=1 // pred_region
      %115 = dma.done [#allocation9], 512
    $region85: #{tpu_custom_call.1} parent=1 // pred_fallthru
      _
    %v116 = vld [vmem:[#allocation2] sm:$0xff]
    %v117 = vld [vmem:[#allocation2 + $0x8] sm:$0xff]
    %v118 = vld [vmem:[#allocation5] sm:$0xff]
    %v119 = vld [vmem:[#allocation5 + $0x8] sm:$0xff]
    %v120 = vld [vmem:[%s2] sm:$0xff]
    %v121 = vld [vmem:[%s2 + $0x8] sm:$0xff]
    %v122 = vld [vmem:[%s2 + $0x10] sm:$0xff]
    %v123 = vld [vmem:[%s2 + $0x18] sm:$0xff]
    %v124 = vld [vmem:[%s3] sm:$0x1]
    %v126 = vlaneseq
    %v127 = vshrl.u32 %v126, 7
    %v128 = vsub.s32 0, %v127
    %v129 = vrot.slane %v124, %v128
    %vm131 = vcmask 261120
    %v133 = vsel %vm131, %v116, 0
    %v136 = vsel %vm131, %v117, 0
    %138 = vmatprep.subr.mxu0 0.0
    %139 = vmatpush1.msra.mxu0 %v120
    %140 = vmatprep.subr.mxu0 0.0
    %141 = vmatpush1.msra.mxu0 %v121
    %142 = vmatprep.subr.mxu0 0.0
    %143 = vmatpush1.msra.mxu0 %v122
    %144 = vmatprep.subr.mxu0 0.0
    %145 = vmatpush1.msra.mxu0 %v123
    %146 = vmatprep.subr.mxu0 0.0
    %147 = vmatpush1.msra.mxu0 0.0
    %148 = vmatprep.subr.mxu0 0.0
    %149 = vmatpush1.msra.mxu0 0.0
    %150 = vmatprep.subr.mxu0 0.0
    %151 = vmatpush1.msra.mxu0 0.0
    %152 = vmatprep.subr.mxu0 0.0
    %153 = vmatpush1.msra.mxu0 0.0
    %154 = vmatprep.subr.mxu0 0.0
    %155 = vmatpush1.msra.mxu0 0.0
    %156 = vmatprep.subr.mxu0 0.0
    %157 = vmatpush1.msra.mxu0 0.0
    %158 = vmatprep.subr.mxu0 0.0
    %159 = vmatpush1.msra.mxu0 0.0
    %160 = vmatprep.subr.mxu0 0.0
    %161 = vmatpush1.msra.mxu0 0.0
    %162 = vmatprep.subr.mxu0 0.0
    %163 = vmatpush1.msra.mxu0 0.0
    %164 = vmatprep.subr.mxu0 0.0
    %165 = vmatpush1.msra.mxu0 0.0
    %166 = vmatprep.subr.mxu0 0.0
    %167 = vmatpush1.msra.mxu0 0.0
    %168 = vmatprep.subr.mxu0 0.0
    %169 = vmatpush1.msra.mxu0 0.0
    %170 = vmatprep.subr.mxu0 0.0
    %171 = vmatpush1.msra.mxu0 0.0
    %172 = vmatprep.subr.mxu0 0.0
    %173 = vmatpush1.msra.mxu0 0.0
    %174 = vmatprep.subr.mxu0 0.0
    %175 = vmatpush1.msra.mxu0 0.0
    %176 = vmatprep.subr.mxu0 0.0
    %177 = vmatpush1.msra.mxu0 0.0
    %178 = vmatprep.subr.mxu0 0.0
    %179 = vmatpush1.msra.mxu0 0.0
    %180 = vmatprep.subr.mxu0 0.0
    %181 = vmatpush1.msra.mxu0 0.0
    %182 = vmatprep.subr.mxu0 0.0
    %183 = vmatpush1.msra.mxu0 0.0
    %184 = vmatprep.subr.mxu0 0.0
    %185 = vmatpush1.msra.mxu0 0.0
    %186 = vmatprep.subr.mxu0 0.0
    %187 = vmatpush1.msra.mxu0 0.0
    %188 = vmatprep.subr.mxu0 0.0
    %189 = vmatpush1.msra.mxu0 0.0
    %190 = vmatprep.subr.mxu0 0.0
    %191 = vmatpush1.msra.mxu0 0.0
    %192 = vmatprep.subr.mxu0 0.0
    %193 = vmatpush1.msra.mxu0 0.0
    %194 = vmatprep.subr.mxu0 0.0
    %195 = vmatpush1.msra.mxu0 0.0
    %196 = vmatprep.subr.mxu0 0.0
    %197 = vmatpush1.msra.mxu0 0.0
    %198 = vmatprep.subr.mxu0 0.0
    %199 = vmatpush1.msra.mxu0 0.0
    %200 = vmatprep.subr.mxu0 0.0
    %201 = vmatpush1.msra.mxu0 0.0
    %202 = vmatprep.mubr.f32.mxu0 0.0
    %203 = vmatmul.mubr.f32.gmra.mrb[0].mxu0 %v133
    %v204 = vpop.f32.mrb[0].mxu0
    %v205 = vadd.f32 %v129, %v204
    %v206 = vpop.f32.mrb[0].mxu0
    %207 = vmatprep.mubr.f32.mxu0 0.0
    %208 = vmatmul.mubr.f32.gmra.mrb[0].mxu0 %v136
    %v209 = vpop.f32.mrb[0].mxu0
    %v210 = vadd.f32 %v129, %v209
    %v211 = vpop.f32.mrb[0].mxu0
    %212 = vdwg.mxu0
    %v213 = vmul.f32 %v205, 0.25
    %v214 = vmul.f32 %v210, 0.25
    %v215 = vld [vmem:[%s4] sm:$0xff]
    %v216 = vld [vmem:[%s4 + $0x8] sm:$0xff]
    %v217 = vld [vmem:[%s4 + $0x10] sm:$0xff]
    %v218 = vld [vmem:[%s4 + $0x18] sm:$0xff]
    %221 = vrot.lane.b32.xlu0 %v205, 96
    %v222 = vpop.permute.xlu0 %221
    %223 = vrot.lane.b32.xlu0 %v210, 96
    %v224 = vpop.permute.xlu0 %223
    %vm225 = vcmask 130048
    %v227 = vsel %vm225, %v213, 0
    %v230 = vsel %vm225, %v214, 0
    %v232 = vsel %vm225, %v222, 0
    %v234 = vsel %vm225, %v224, 0
    %236 = vmatprep.subr.mxu0 0.0
    %237 = vmatpush1.xpose.msra.mxu0 %v232
    %238 = vmatprep.subr.mxu0 0.0
    %239 = vmatpush1.xpose.msra.mxu0 %v234
    %240 = vmatprep.subr.mxu0 0.0
    %241 = vmatpush1.xpose.msra.mxu0 0.0
    %242 = vmatprep.subr.mxu0 0.0
    %243 = vmatpush1.xpose.msra.mxu0 0.0
    %244 = vmatprep.subr.mxu0 0.0
    %245 = vmatpush1.xpose.msra.mxu0 0.0
    %246 = vmatprep.subr.mxu0 0.0
    %247 = vmatpush1.xpose.msra.mxu0 0.0
    %248 = vmatprep.subr.mxu0 0.0
    %249 = vmatpush1.xpose.msra.mxu0 0.0
    %250 = vmatprep.subr.mxu0 0.0
    %251 = vmatpush1.xpose.msra.mxu0 0.0
    %252 = vmatprep.subr.mxu0 0.0
    %253 = vmatpush1.xpose.msra.mxu0 0.0
    %254 = vmatprep.subr.mxu0 0.0
    %255 = vmatpush1.xpose.msra.mxu0 0.0
    %256 = vmatprep.subr.mxu0 0.0
    %257 = vmatpush1.xpose.msra.mxu0 0.0
    %258 = vmatprep.subr.mxu0 0.0
    %259 = vmatpush1.xpose.msra.mxu0 0.0
    %260 = vmatprep.subr.mxu0 0.0
    %261 = vmatpush1.xpose.msra.mxu0 0.0
    %262 = vmatprep.subr.mxu0 0.0
    %263 = vmatpush1.xpose.msra.mxu0 0.0
    %264 = vmatprep.subr.mxu0 0.0
    %265 = vmatpush1.xpose.msra.mxu0 0.0
    %266 = vmatprep.subr.mxu0 0.0
    %267 = vmatpush1.xpose.msra.mxu0 0.0
    %268 = vmatprep.subr.mxu0 0.0
    %269 = vmatpush1.xpose.msra.mxu0 0.0
    %270 = vmatprep.subr.mxu0 0.0
    %271 = vmatpush1.xpose.msra.mxu0 0.0
    %272 = vmatprep.subr.mxu0 0.0
    %273 = vmatpush1.xpose.msra.mxu0 0.0
    %274 = vmatprep.subr.mxu0 0.0
    %275 = vmatpush1.xpose.msra.mxu0 0.0
    %276 = vmatprep.subr.mxu0 0.0
    %277 = vmatpush1.xpose.msra.mxu0 0.0
    %278 = vmatprep.subr.mxu0 0.0
    %279 = vmatpush1.xpose.msra.mxu0 0.0
    %280 = vmatprep.subr.mxu0 0.0
    %281 = vmatpush1.xpose.msra.mxu0 0.0
    %282 = vmatprep.subr.mxu0 0.0
    %283 = vmatpush1.xpose.msra.mxu0 0.0
    %284 = vmatprep.subr.mxu0 0.0
    %285 = vmatpush1.xpose.msra.mxu0 0.0
    %286 = vmatprep.subr.mxu0 0.0
    %287 = vmatpush1.xpose.msra.mxu0 0.0
    %288 = vmatprep.subr.mxu0 0.0
    %289 = vmatpush1.xpose.msra.mxu0 0.0
    %290 = vmatprep.subr.mxu0 0.0
    %291 = vmatpush1.xpose.msra.mxu0 0.0
    %292 = vmatprep.subr.mxu0 0.0
    %293 = vmatpush1.xpose.msra.mxu0 0.0
    %294 = vmatprep.subr.mxu0 0.0
    %295 = vmatpush1.xpose.msra.mxu0 0.0
    %296 = vmatprep.subr.mxu0 0.0
    %297 = vmatpush1.xpose.msra.mxu0 0.0
    %298 = vmatprep.subr.mxu0 0.0
    %299 = vmatpush1.xpose.msra.mxu0 0.0
    %300 = vmatprep.mubr.f32.mxu0 0.0
    %301 = vmatmul.mubr.f32.gmra.mrb[0].mxu0 %v227
    %v302 = vpop.f32.mrb[0].mxu0
    %v303 = vadd.f32 %v118, %v302
    %v304 = vpop.f32.mrb[0].mxu0
    %305 = vmatprep.mubr.f32.mxu0 0.0
    %306 = vmatmul.mubr.f32.gmra.mrb[0].mxu0 %v230
    %v307 = vpop.f32.mrb[0].mxu0
    %v308 = vadd.f32 %v119, %v307
    %v309 = vpop.f32.mrb[0].mxu0
    %310 = vdwg.mxu0
    %v311 = vsel %vm225, %v303, -inf
    %312 = vmax.xlane.f32.xlu0 %v311
    %v313 = vpop.xlane.xlu0 %312
    %v314 = vsel %vm225, %v308, -inf
    %315 = vmax.xlane.f32.xlu0 %v314
    %v316 = vpop.xlane.xlu0 %315
    %v317 = vsub.f32 %v303, %v313
    %v318 = vsub.f32 %v308, %v316
    %v319 = vmul.f32 %v317, 1.442695
    %v320 = vpow.pop %v319
    %v321 = vmul.f32 %v318, 1.442695
    %v322 = vpow.pop %v321
    %v323 = vsel %vm225, %v320, 0.0
    %324 = vadd.xlane.f32.xlu0 %v323
    %v325 = vpop.xlane.xlu0 %324
    %v326 = vsel %vm225, %v322, 0.0
    %327 = vadd.xlane.f32.xlu0 %v326
    %v328 = vpop.xlane.xlu0 %327
    %v329 = vrcp.pop %v325
    %v330 = vrcp.pop %v328
    %v331 = vmul.f32 %v320, %v329
    %v332 = vmul.f32 %v322, %v330
    %333 = vrot.lane.b32.xlu0 %v205, 64
    %v334 = vpop.permute.xlu0 %333
    %335 = vrot.lane.b32.xlu0 %v210, 64
    %v336 = vpop.permute.xlu0 %335
    %v340 = vsel %vm225, %v331, 0
    %v343 = vsel %vm225, %v332, 0
    %345 = vmatprep.subr.mxu0 0.0
    %346 = vmatpush1.msra.mxu0 %v334
    %347 = vmatprep.subr.mxu0 0.0
    %348 = vmatpush1.msra.mxu0 %v336
    %349 = vmatprep.subr.mxu0 0.0
    %350 = vmatpush1.msra.mxu0 0.0
    %351 = vmatprep.subr.mxu0 0.0
    %352 = vmatpush1.msra.mxu0 0.0
    %353 = vmatprep.subr.mxu0 0.0
    %354 = vmatpush1.msra.mxu0 0.0
    %355 = vmatprep.subr.mxu0 0.0
    %356 = vmatpush1.msra.mxu0 0.0
    %357 = vmatprep.subr.mxu0 0.0
    %358 = vmatpush1.msra.mxu0 0.0
    %359 = vmatprep.subr.mxu0 0.0
    %360 = vmatpush1.msra.mxu0 0.0
    %361 = vmatprep.subr.mxu0 0.0
    %362 = vmatpush1.msra.mxu0 0.0
    %363 = vmatprep.subr.mxu0 0.0
    %364 = vmatpush1.msra.mxu0 0.0
    %365 = vmatprep.subr.mxu0 0.0
    %366 = vmatpush1.msra.mxu0 0.0
    %367 = vmatprep.subr.mxu0 0.0
    %368 = vmatpush1.msra.mxu0 0.0
    %369 = vmatprep.subr.mxu0 0.0
    %370 = vmatpush1.msra.mxu0 0.0
    %371 = vmatprep.subr.mxu0 0.0
    %372 = vmatpush1.msra.mxu0 0.0
    %373 = vmatprep.subr.mxu0 0.0
    %374 = vmatpush1.msra.mxu0 0.0
    %375 = vmatprep.subr.mxu0 0.0
    %376 = vmatpush1.msra.mxu0 0.0
    %377 = vmatprep.subr.mxu0 0.0
    %378 = vmatpush1.msra.mxu0 0.0
    %379 = vmatprep.subr.mxu0 0.0
    %380 = vmatpush1.msra.mxu0 0.0
    %381 = vmatprep.subr.mxu0 0.0
    %382 = vmatpush1.msra.mxu0 0.0
    %383 = vmatprep.subr.mxu0 0.0
    %384 = vmatpush1.msra.mxu0 0.0
    %385 = vmatprep.subr.mxu0 0.0
    %386 = vmatpush1.msra.mxu0 0.0
    %387 = vmatprep.subr.mxu0 0.0
    %388 = vmatpush1.msra.mxu0 0.0
    %389 = vmatprep.subr.mxu0 0.0
    %390 = vmatpush1.msra.mxu0 0.0
    %391 = vmatprep.subr.mxu0 0.0
    %392 = vmatpush1.msra.mxu0 0.0
    %393 = vmatprep.subr.mxu0 0.0
    %394 = vmatpush1.msra.mxu0 0.0
    %395 = vmatprep.subr.mxu0 0.0
    %396 = vmatpush1.msra.mxu0 0.0
    %397 = vmatprep.subr.mxu0 0.0
    %398 = vmatpush1.msra.mxu0 0.0
    %399 = vmatprep.subr.mxu0 0.0
    %400 = vmatpush1.msra.mxu0 0.0
    %401 = vmatprep.subr.mxu0 0.0
    %402 = vmatpush1.msra.mxu0 0.0
    %403 = vmatprep.subr.mxu0 0.0
    %404 = vmatpush1.msra.mxu0 0.0
    %405 = vmatprep.subr.mxu0 0.0
    %406 = vmatpush1.msra.mxu0 0.0
    %407 = vmatprep.subr.mxu0 0.0
    %408 = vmatpush1.msra.mxu0 0.0
    %409 = vmatprep.mubr.f32.mxu0 0.0
    %410 = vmatmul.mubr.f32.gmra.mrb[0].mxu0 %v340
    %v411 = vpop.f32.mrb[0].mxu0
    %v412 = vadd.f32 0.0, %v411
    %v413 = vpop.f32.mrb[0].mxu0
    %414 = vmatprep.mubr.f32.mxu0 0.0
    %415 = vmatmul.mubr.f32.gmra.mrb[0].mxu0 %v343
    %v416 = vpop.f32.mrb[0].mxu0
    %v417 = vadd.f32 0.0, %v416
    %v418 = vpop.f32.mrb[0].mxu0
    %419 = vdwg.mxu0
    %420 = vrot.lane.b32.xlu0 %v213, 112
    %v421 = vpop.permute.xlu0 %420
    %422 = vrot.lane.b32.xlu0 %v214, 112
    %v423 = vpop.permute.xlu0 %422
    %424 = vrot.lane.b32.xlu0 %v205, 80
    %v425 = vpop.permute.xlu0 %424
    %426 = vrot.lane.b32.xlu0 %v210, 80
    %v427 = vpop.permute.xlu0 %426
    %v428 = vsel %vm225, %v421, 0
    %v430 = vsel %vm225, %v423, 0
    %v432 = vsel %vm225, %v425, 0
    %v434 = vsel %vm225, %v427, 0
    %436 = vmatprep.subr.mxu0 0.0
    %437 = vmatpush1.xpose.msra.mxu0 %v432
    %438 = vmatprep.subr.mxu0 0.0
    %439 = vmatpush1.xpose.msra.mxu0 %v434
    %440 = vmatprep.subr.mxu0 0.0
    %441 = vmatpush1.xpose.msra.mxu0 0.0
    %442 = vmatprep.subr.mxu0 0.0
    %443 = vmatpush1.xpose.msra.mxu0 0.0
    %444 = vmatprep.subr.mxu0 0.0
    %445 = vmatpush1.xpose.msra.mxu0 0.0
    %446 = vmatprep.subr.mxu0 0.0
    %447 = vmatpush1.xpose.msra.mxu0 0.0
    %448 = vmatprep.subr.mxu0 0.0
    %449 = vmatpush1.xpose.msra.mxu0 0.0
    %450 = vmatprep.subr.mxu0 0.0
    %451 = vmatpush1.xpose.msra.mxu0 0.0
    %452 = vmatprep.subr.mxu0 0.0
    %453 = vmatpush1.xpose.msra.mxu0 0.0
    %454 = vmatprep.subr.mxu0 0.0
    %455 = vmatpush1.xpose.msra.mxu0 0.0
    %456 = vmatprep.subr.mxu0 0.0
    %457 = vmatpush1.xpose.msra.mxu0 0.0
    %458 = vmatprep.subr.mxu0 0.0
    %459 = vmatpush1.xpose.msra.mxu0 0.0
    %460 = vmatprep.subr.mxu0 0.0
    %461 = vmatpush1.xpose.msra.mxu0 0.0
    %462 = vmatprep.subr.mxu0 0.0
    %463 = vmatpush1.xpose.msra.mxu0 0.0
    %464 = vmatprep.subr.mxu0 0.0
    %465 = vmatpush1.xpose.msra.mxu0 0.0
    %466 = vmatprep.subr.mxu0 0.0
    %467 = vmatpush1.xpose.msra.mxu0 0.0
    %468 = vmatprep.subr.mxu0 0.0
    %469 = vmatpush1.xpose.msra.mxu0 0.0
    %470 = vmatprep.subr.mxu0 0.0
    %471 = vmatpush1.xpose.msra.mxu0 0.0
    %472 = vmatprep.subr.mxu0 0.0
    %473 = vmatpush1.xpose.msra.mxu0 0.0
    %474 = vmatprep.subr.mxu0 0.0
    %475 = vmatpush1.xpose.msra.mxu0 0.0
    %476 = vmatprep.subr.mxu0 0.0
    %477 = vmatpush1.xpose.msra.mxu0 0.0
    %478 = vmatprep.subr.mxu0 0.0
    %479 = vmatpush1.xpose.msra.mxu0 0.0
    %480 = vmatprep.subr.mxu0 0.0
    %481 = vmatpush1.xpose.msra.mxu0 0.0
    %482 = vmatprep.subr.mxu0 0.0
    %483 = vmatpush1.xpose.msra.mxu0 0.0
    %484 = vmatprep.subr.mxu0 0.0
    %485 = vmatpush1.xpose.msra.mxu0 0.0
    %486 = vmatprep.subr.mxu0 0.0
    %487 = vmatpush1.xpose.msra.mxu0 0.0
    %488 = vmatprep.subr.mxu0 0.0
    %489 = vmatpush1.xpose.msra.mxu0 0.0
    %490 = vmatprep.subr.mxu0 0.0
    %491 = vmatpush1.xpose.msra.mxu0 0.0
    %492 = vmatprep.subr.mxu0 0.0
    %493 = vmatpush1.xpose.msra.mxu0 0.0
    %494 = vmatprep.subr.mxu0 0.0
    %495 = vmatpush1.xpose.msra.mxu0 0.0
    %496 = vmatprep.subr.mxu0 0.0
    %497 = vmatpush1.xpose.msra.mxu0 0.0
    %498 = vmatprep.subr.mxu0 0.0
    %499 = vmatpush1.xpose.msra.mxu0 0.0
    %500 = vmatprep.mubr.f32.mxu0 0.0
    %501 = vmatmul.mubr.f32.gmra.mrb[0].mxu0 %v428
    %v502 = vpop.f32.mrb[0].mxu0
    %v503 = vadd.f32 %v118, %v502
    %v504 = vpop.f32.mrb[0].mxu0
    %505 = vmatprep.mubr.f32.mxu0 0.0
    %506 = vmatmul.mubr.f32.gmra.mrb[0].mxu0 %v430
    %v507 = vpop.f32.mrb[0].mxu0
    %v508 = vadd.f32 %v119, %v507
    %v509 = vpop.f32.mrb[0].mxu0
    %510 = vdwg.mxu0
    %v511 = vsel %vm225, %v503, -inf
    %512 = vmax.xlane.f32.xlu0 %v511
    %v513 = vpop.xlane.xlu0 %512
    %v514 = vsel %vm225, %v508, -inf
    %515 = vmax.xlane.f32.xlu0 %v514
    %v516 = vpop.xlane.xlu0 %515
    %v517 = vsub.f32 %v503, %v513
    %v518 = vsub.f32 %v508, %v516
    %v519 = vmul.f32 %v517, 1.442695
    %v520 = vpow.pop %v519
    %v521 = vmul.f32 %v518, 1.442695
    %v522 = vpow.pop %v521
    %v523 = vsel %vm225, %v520, 0.0
    %524 = vadd.xlane.f32.xlu0 %v523
    %v525 = vpop.xlane.xlu0 %524
    %v526 = vsel %vm225, %v522, 0.0
    %527 = vadd.xlane.f32.xlu0 %v526
    %v528 = vpop.xlane.xlu0 %527
    %v529 = vrcp.pop %v525
    %v530 = vrcp.pop %v528
    %v531 = vmul.f32 %v520, %v529
    %v532 = vmul.f32 %v522, %v530
    %533 = vrot.lane.b32.xlu0 %v205, 48
    %v534 = vpop.permute.xlu0 %533
    %535 = vrot.lane.b32.xlu0 %v210, 48
    %v536 = vpop.permute.xlu0 %535
    %v540 = vsel %vm225, %v531, 0
    %v543 = vsel %vm225, %v532, 0
    %545 = vmatprep.subr.mxu0 0.0
    %546 = vmatpush1.msra.mxu0 %v534
    %547 = vmatprep.subr.mxu0 0.0
    %548 = vmatpush1.msra.mxu0 %v536
    %549 = vmatprep.subr.mxu0 0.0
    %550 = vmatpush1.msra.mxu0 0.0
    %551 = vmatprep.subr.mxu0 0.0
    %552 = vmatpush1.msra.mxu0 0.0
    %553 = vmatprep.subr.mxu0 0.0
    %554 = vmatpush1.msra.mxu0 0.0
    %555 = vmatprep.subr.mxu0 0.0
    %556 = vmatpush1.msra.mxu0 0.0
    %557 = vmatprep.subr.mxu0 0.0
    %558 = vmatpush1.msra.mxu0 0.0
    %559 = vmatprep.subr.mxu0 0.0
    %560 = vmatpush1.msra.mxu0 0.0
    %561 = vmatprep.subr.mxu0 0.0
    %562 = vmatpush1.msra.mxu0 0.0
    %563 = vmatprep.subr.mxu0 0.0
    %564 = vmatpush1.msra.mxu0 0.0
    %565 = vmatprep.subr.mxu0 0.0
    %566 = vmatpush1.msra.mxu0 0.0
    %567 = vmatprep.subr.mxu0 0.0
    %568 = vmatpush1.msra.mxu0 0.0
    %569 = vmatprep.subr.mxu0 0.0
    %570 = vmatpush1.msra.mxu0 0.0
    %571 = vmatprep.subr.mxu0 0.0
    %572 = vmatpush1.msra.mxu0 0.0
    %573 = vmatprep.subr.mxu0 0.0
    %574 = vmatpush1.msra.mxu0 0.0
    %575 = vmatprep.subr.mxu0 0.0
    %576 = vmatpush1.msra.mxu0 0.0
    %577 = vmatprep.subr.mxu0 0.0
    %578 = vmatpush1.msra.mxu0 0.0
    %579 = vmatprep.subr.mxu0 0.0
    %580 = vmatpush1.msra.mxu0 0.0
    %581 = vmatprep.subr.mxu0 0.0
    %582 = vmatpush1.msra.mxu0 0.0
    %583 = vmatprep.subr.mxu0 0.0
    %584 = vmatpush1.msra.mxu0 0.0
    %585 = vmatprep.subr.mxu0 0.0
    %586 = vmatpush1.msra.mxu0 0.0
    %587 = vmatprep.subr.mxu0 0.0
    %588 = vmatpush1.msra.mxu0 0.0
    %589 = vmatprep.subr.mxu0 0.0
    %590 = vmatpush1.msra.mxu0 0.0
    %591 = vmatprep.subr.mxu0 0.0
    %592 = vmatpush1.msra.mxu0 0.0
    %593 = vmatprep.subr.mxu0 0.0
    %594 = vmatpush1.msra.mxu0 0.0
    %595 = vmatprep.subr.mxu0 0.0
    %596 = vmatpush1.msra.mxu0 0.0
    %597 = vmatprep.subr.mxu0 0.0
    %598 = vmatpush1.msra.mxu0 0.0
    %599 = vmatprep.subr.mxu0 0.0
    %600 = vmatpush1.msra.mxu0 0.0
    %601 = vmatprep.subr.mxu0 0.0
    %602 = vmatpush1.msra.mxu0 0.0
    %603 = vmatprep.subr.mxu0 0.0
    %604 = vmatpush1.msra.mxu0 0.0
    %605 = vmatprep.subr.mxu0 0.0
    %606 = vmatpush1.msra.mxu0 0.0
    %607 = vmatprep.subr.mxu0 0.0
    %608 = vmatpush1.msra.mxu0 0.0
    %609 = vmatprep.mubr.f32.mxu0 0.0
    %610 = vmatmul.mubr.f32.gmra.mrb[0].mxu0 %v540
    %v611 = vpop.f32.mrb[0].mxu0
    %v612 = vadd.f32 0.0, %v611
    %v613 = vpop.f32.mrb[0].mxu0
    %614 = vmatprep.mubr.f32.mxu0 0.0
    %615 = vmatmul.mubr.f32.gmra.mrb[0].mxu0 %v543
    %v616 = vpop.f32.mrb[0].mxu0
    %v617 = vadd.f32 0.0, %v616
    %v618 = vpop.f32.mrb[0].mxu0
    %619 = vdwg.mxu0
    %v621 = vsel %vm225, %v612, 0
    %v624 = vsel %vm225, %v617, 0
    %626 = vmatprep.subr.mxu0 0.0
    %627 = vmatpush1.msra.mxu0 %v217
    %628 = vmatprep.subr.mxu0 0.0
    %629 = vmatpush1.msra.mxu0 %v218
    %630 = vmatprep.subr.mxu0 0.0
    %631 = vmatpush1.msra.mxu0 0.0
    %632 = vmatprep.subr.mxu0 0.0
    %633 = vmatpush1.msra.mxu0 0.0
    %634 = vmatprep.subr.mxu0 0.0
    %635 = vmatpush1.msra.mxu0 0.0
    %636 = vmatprep.subr.mxu0 0.0
    %637 = vmatpush1.msra.mxu0 0.0
    %638 = vmatprep.subr.mxu0 0.0
    %639 = vmatpush1.msra.mxu0 0.0
    %640 = vmatprep.subr.mxu0 0.0
    %641 = vmatpush1.msra.mxu0 0.0
    %642 = vmatprep.subr.mxu0 0.0
    %643 = vmatpush1.msra.mxu0 0.0
    %644 = vmatprep.subr.mxu0 0.0
    %645 = vmatpush1.msra.mxu0 0.0
    %646 = vmatprep.subr.mxu0 0.0
    %647 = vmatpush1.msra.mxu0 0.0
    %648 = vmatprep.subr.mxu0 0.0
    %649 = vmatpush1.msra.mxu0 0.0
    %650 = vmatprep.subr.mxu0 0.0
    %651 = vmatpush1.msra.mxu0 0.0
    %652 = vmatprep.subr.mxu0 0.0
    %653 = vmatpush1.msra.mxu0 0.0
    %654 = vmatprep.subr.mxu0 0.0
    %655 = vmatpush1.msra.mxu0 0.0
    %656 = vmatprep.subr.mxu0 0.0
    %657 = vmatpush1.msra.mxu0 0.0
    %658 = vmatprep.subr.mxu0 0.0
    %659 = vmatpush1.msra.mxu0 0.0
    %660 = vmatprep.subr.mxu0 0.0
    %661 = vmatpush1.msra.mxu0 0.0
    %662 = vmatprep.subr.mxu0 0.0
    %663 = vmatpush1.msra.mxu0 0.0
    %664 = vmatprep.subr.mxu0 0.0
    %665 = vmatpush1.msra.mxu0 0.0
    %666 = vmatprep.subr.mxu0 0.0
    %667 = vmatpush1.msra.mxu0 0.0
    %668 = vmatprep.subr.mxu0 0.0
    %669 = vmatpush1.msra.mxu0 0.0
    %670 = vmatprep.subr.mxu0 0.0
    %671 = vmatpush1.msra.mxu0 0.0
    %672 = vmatprep.subr.mxu0 0.0
    %673 = vmatpush1.msra.mxu0 0.0
    %674 = vmatprep.subr.mxu0 0.0
    %675 = vmatpush1.msra.mxu0 0.0
    %676 = vmatprep.subr.mxu0 0.0
    %677 = vmatpush1.msra.mxu0 0.0
    %678 = vmatprep.subr.mxu0 0.0
    %679 = vmatpush1.msra.mxu0 0.0
    %680 = vmatprep.subr.mxu0 0.0
    %681 = vmatpush1.msra.mxu0 0.0
    %682 = vmatprep.subr.mxu0 0.0
    %683 = vmatpush1.msra.mxu0 0.0
    %684 = vmatprep.subr.mxu0 0.0
    %685 = vmatpush1.msra.mxu0 0.0
    %686 = vmatprep.subr.mxu0 0.0
    %687 = vmatpush1.msra.mxu0 0.0
    %688 = vmatprep.subr.mxu0 0.0
    %689 = vmatpush1.msra.mxu0 0.0
    %690 = vmatprep.mubr.f32.mxu0 0.0
    %691 = vmatmul.mubr.f32.gmra.mrb[0].mxu0 %v621
    %v692 = vpop.f32.mrb[0].mxu0
    %v693 = vadd.f32 0.0, %v692
    %v694 = vpop.f32.mrb[0].mxu0
    %695 = vmatprep.mubr.f32.mxu0 0.0
    %696 = vmatmul.mubr.f32.gmra.mrb[0].mxu0 %v624
    %v697 = vpop.f32.mrb[0].mxu0
    %v698 = vadd.f32 0.0, %v697
    %v699 = vpop.f32.mrb[0].mxu0
    %700 = vdwg.mxu0
    %v702 = vsel %vm225, %v412, 0
    %v705 = vsel %vm225, %v417, 0
    %707 = vmatprep.subr.mxu0 0.0
    %708 = vmatpush1.msra.mxu0 %v215
    %709 = vmatprep.subr.mxu0 0.0
    %710 = vmatpush1.msra.mxu0 %v216
    %711 = vmatprep.subr.mxu0 0.0
    %712 = vmatpush1.msra.mxu0 0.0
    %713 = vmatprep.subr.mxu0 0.0
    %714 = vmatpush1.msra.mxu0 0.0
    %715 = vmatprep.subr.mxu0 0.0
    %716 = vmatpush1.msra.mxu0 0.0
    %717 = vmatprep.subr.mxu0 0.0
    %718 = vmatpush1.msra.mxu0 0.0
    %719 = vmatprep.subr.mxu0 0.0
    %720 = vmatpush1.msra.mxu0 0.0
    %721 = vmatprep.subr.mxu0 0.0
    %722 = vmatpush1.msra.mxu0 0.0
    %723 = vmatprep.subr.mxu0 0.0
    %724 = vmatpush1.msra.mxu0 0.0
    %725 = vmatprep.subr.mxu0 0.0
    %726 = vmatpush1.msra.mxu0 0.0
    %727 = vmatprep.subr.mxu0 0.0
    %728 = vmatpush1.msra.mxu0 0.0
    %729 = vmatprep.subr.mxu0 0.0
    %730 = vmatpush1.msra.mxu0 0.0
    %731 = vmatprep.subr.mxu0 0.0
    %732 = vmatpush1.msra.mxu0 0.0
    %733 = vmatprep.subr.mxu0 0.0
    %734 = vmatpush1.msra.mxu0 0.0
    %735 = vmatprep.subr.mxu0 0.0
    %736 = vmatpush1.msra.mxu0 0.0
    %737 = vmatprep.subr.mxu0 0.0
    %738 = vmatpush1.msra.mxu0 0.0
    %739 = vmatprep.subr.mxu0 0.0
    %740 = vmatpush1.msra.mxu0 0.0
    %741 = vmatprep.subr.mxu0 0.0
    %742 = vmatpush1.msra.mxu0 0.0
    %743 = vmatprep.subr.mxu0 0.0
    %744 = vmatpush1.msra.mxu0 0.0
    %745 = vmatprep.subr.mxu0 0.0
    %746 = vmatpush1.msra.mxu0 0.0
    %747 = vmatprep.subr.mxu0 0.0
    %748 = vmatpush1.msra.mxu0 0.0
    %749 = vmatprep.subr.mxu0 0.0
    %750 = vmatpush1.msra.mxu0 0.0
    %751 = vmatprep.subr.mxu0 0.0
    %752 = vmatpush1.msra.mxu0 0.0
    %753 = vmatprep.subr.mxu0 0.0
    %754 = vmatpush1.msra.mxu0 0.0
    %755 = vmatprep.subr.mxu0 0.0
    %756 = vmatpush1.msra.mxu0 0.0
    %757 = vmatprep.subr.mxu0 0.0
    %758 = vmatpush1.msra.mxu0 0.0
    %759 = vmatprep.subr.mxu0 0.0
    %760 = vmatpush1.msra.mxu0 0.0
    %761 = vmatprep.subr.mxu0 0.0
    %762 = vmatpush1.msra.mxu0 0.0
    %763 = vmatprep.subr.mxu0 0.0
    %764 = vmatpush1.msra.mxu0 0.0
    %765 = vmatprep.subr.mxu0 0.0
    %766 = vmatpush1.msra.mxu0 0.0
    %767 = vmatprep.subr.mxu0 0.0
    %768 = vmatpush1.msra.mxu0 0.0
    %769 = vmatprep.subr.mxu0 0.0
    %770 = vmatpush1.msra.mxu0 0.0
    %771 = vmatprep.mubr.f32.mxu0 0.0
    %772 = vmatmul.mubr.f32.gmra.mrb[0].mxu0 %v702
    %v773 = vpop.f32.mrb[0].mxu0
    %v774 = vadd.f32 %v693, %v773
    %v775 = vpop.f32.mrb[0].mxu0
    %776 = vmatprep.mubr.f32.mxu0 0.0
    %777 = vmatmul.mubr.f32.gmra.mrb[0].mxu0 %v705
    %v778 = vpop.f32.mrb[0].mxu0
    %v779 = vadd.f32 %v698, %v778
    %v780 = vpop.f32.mrb[0].mxu0
    %781 = vdwg.mxu0
    %v782 = vld [vmem:[%s5] sm:$0x1]
    %v784 = vlaneseq
    %v785 = vshrl.u32 %v784, 7
    %v786 = vsub.s32 0, %v785
    %v787 = vrot.slane %v782, %v786
    %v789 = vadd.f32 %v774, %v787
    %v790 = vadd.f32 %v779, %v787
    %v791 = vadd.f32 %v116, %v789
    %v792 = vadd.f32 %v117, %v790
    %v793 = vld [vmem:[%s6] sm:$0x1]
    %v794 = vld [vmem:[%s7] sm:$0x1]
    %v795 = vsel %vm131, %v791, 0.0
    %796 = vadd.xlane.f32.xlu0 %v795
    %v797 = vpop.xlane.xlu0 %796
    %v798 = vsel %vm131, %v792, 0.0
    %799 = vadd.xlane.f32.xlu0 %v798
    %v800 = vpop.xlane.xlu0 %799
    %v801 = vrcp.pop 32.0
    %v802 = vmul.f32 %v797, %v801
    %v803 = vmul.f32 %v800, %v801
    %v804 = vsub.f32 %v791, %v802
    %v805 = vsub.f32 %v792, %v803
    %v806 = vmul.f32 %v804, %v804
    %v807 = vmul.f32 %v805, %v805
    %v808 = vsel %vm131, %v806, 0.0
    %809 = vadd.xlane.f32.xlu0 %v808
    %v810 = vpop.xlane.xlu0 %809
    %v811 = vsel %vm131, %v807, 0.0
    %812 = vadd.xlane.f32.xlu0 %v811
    %v813 = vpop.xlane.xlu0 %812
    %v814 = vmul.f32 %v810, %v801
    %v815 = vmul.f32 %v813, %v801
    %v816 = vadd.f32 %v814, 1e-12
    %v817 = vadd.f32 %v815, 1e-12
    %v818 = vrsqrt.pop %v816
    %v819 = vrsqrt.pop %v817
    %v820 = vmul.f32 %v804, %v818
    %v821 = vmul.f32 %v805, %v819
    %v823 = vlaneseq
    %v824 = vshrl.u32 %v823, 7
    %v825 = vsub.s32 0, %v824
    %v826 = vrot.slane %v793, %v825
    %v828 = vmul.f32 %v820, %v826
    %v829 = vmul.f32 %v821, %v826
    %v831 = vlaneseq
    %v832 = vshrl.u32 %v831, 7
    %v833 = vsub.s32 0, %v832
    %v834 = vrot.slane %v794, %v833
    %v836 = vadd.f32 %v828, %v834
    %v837 = vadd.f32 %v829, %v834
    %v838 = vld [vmem:[%s8] sm:$0xff]
    %v839 = vld [vmem:[%s8 + $0x8] sm:$0xff]
    %v840 = vld [vmem:[%s8 + $0x10] sm:$0xff]
    %v841 = vld [vmem:[%s8 + $0x18] sm:$0xff]
    %v842 = vld [vmem:[%s9] sm:$0x1]
    %v844 = vlaneseq
    %v845 = vshrl.u32 %v844, 7
    %v846 = vsub.s32 0, %v845
    %v847 = vrot.slane %v842, %v846
    %v850 = vsel %vm131, %v836, 0
    %v853 = vsel %vm131, %v837, 0
    %855 = vmatprep.subr.mxu0 0.0
    %856 = vmatpush1.msra.mxu0 %v838
    %857 = vmatprep.subr.mxu0 0.0
    %858 = vmatpush1.msra.mxu0 %v839
    %859 = vmatprep.subr.mxu0 0.0
    %860 = vmatpush1.msra.mxu0 %v840
    %861 = vmatprep.subr.mxu0 0.0
    %862 = vmatpush1.msra.mxu0 %v841
    %863 = vmatprep.subr.mxu0 0.0
    %864 = vmatpush1.msra.mxu0 0.0
    %865 = vmatprep.subr.mxu0 0.0
    %866 = vmatpush1.msra.mxu0 0.0
    %867 = vmatprep.subr.mxu0 0.0
    %868 = vmatpush1.msra.mxu0 0.0
    %869 = vmatprep.subr.mxu0 0.0
    %870 = vmatpush1.msra.mxu0 0.0
    %871 = vmatprep.subr.mxu0 0.0
    %872 = vmatpush1.msra.mxu0 0.0
    %873 = vmatprep.subr.mxu0 0.0
    %874 = vmatpush1.msra.mxu0 0.0
    %875 = vmatprep.subr.mxu0 0.0
    %876 = vmatpush1.msra.mxu0 0.0
    %877 = vmatprep.subr.mxu0 0.0
    %878 = vmatpush1.msra.mxu0 0.0
    %879 = vmatprep.subr.mxu0 0.0
    %880 = vmatpush1.msra.mxu0 0.0
    %881 = vmatprep.subr.mxu0 0.0
    %882 = vmatpush1.msra.mxu0 0.0
    %883 = vmatprep.subr.mxu0 0.0
    %884 = vmatpush1.msra.mxu0 0.0
    %885 = vmatprep.subr.mxu0 0.0
    %886 = vmatpush1.msra.mxu0 0.0
    %887 = vmatprep.subr.mxu0 0.0
    %888 = vmatpush1.msra.mxu0 0.0
    %889 = vmatprep.subr.mxu0 0.0
    %890 = vmatpush1.msra.mxu0 0.0
    %891 = vmatprep.subr.mxu0 0.0
    %892 = vmatpush1.msra.mxu0 0.0
    %893 = vmatprep.subr.mxu0 0.0
    %894 = vmatpush1.msra.mxu0 0.0
    %895 = vmatprep.subr.mxu0 0.0
    %896 = vmatpush1.msra.mxu0 0.0
    %897 = vmatprep.subr.mxu0 0.0
    %898 = vmatpush1.msra.mxu0 0.0
    %899 = vmatprep.subr.mxu0 0.0
    %900 = vmatpush1.msra.mxu0 0.0
    %901 = vmatprep.subr.mxu0 0.0
    %902 = vmatpush1.msra.mxu0 0.0
    %903 = vmatprep.subr.mxu0 0.0
    %904 = vmatpush1.msra.mxu0 0.0
    %905 = vmatprep.subr.mxu0 0.0
    %906 = vmatpush1.msra.mxu0 0.0
    %907 = vmatprep.subr.mxu0 0.0
    %908 = vmatpush1.msra.mxu0 0.0
    %909 = vmatprep.subr.mxu0 0.0
    %910 = vmatpush1.msra.mxu0 0.0
    %911 = vmatprep.subr.mxu0 0.0
    %912 = vmatpush1.msra.mxu0 0.0
    %913 = vmatprep.subr.mxu0 0.0
    %914 = vmatpush1.msra.mxu0 0.0
    %915 = vmatprep.subr.mxu0 0.0
    %916 = vmatpush1.msra.mxu0 0.0
    %917 = vmatprep.subr.mxu0 0.0
    %918 = vmatpush1.msra.mxu0 0.0
    %919 = vmatprep.mubr.f32.mxu0 0.0
    %920 = vmatmul.mubr.f32.gmra.mrb[0].mxu0 %v850
    %v921 = vpop.f32.mrb[0].mxu0
    %v922 = vadd.f32 %v847, %v921
    %v923 = vpop.f32.mrb[0].mxu0
    %924 = vmatprep.mubr.f32.mxu0 0.0
    %925 = vmatmul.mubr.f32.gmra.mrb[0].mxu0 %v853
    %v926 = vpop.f32.mrb[0].mxu0
    %v927 = vadd.f32 %v847, %v926
    %v928 = vpop.f32.mrb[0].mxu0
    %929 = vdwg.mxu0
    %v930 = vmul.f32 %v922, 0.5
    %v931 = vmul.f32 %v927, 0.5
    %v932 = vmul.f32 %v922, 0.044715
    %v933 = vmul.f32 %v927, 0.044715
    %v934 = vmul.f32 %v932, %v922
    %v935 = vmul.f32 %v933, %v927
    %v936 = vmul.f32 %v934, %v922
    %v937 = vmul.f32 %v935, %v927
    %v938 = vadd.f32 %v922, %v936
    %v939 = vadd.f32 %v927, %v937
    %v940 = vmul.f32 %v938, 0.7978846
    %v941 = vmul.f32 %v939, 0.7978846
    %v942 = vtanh.pop %v940
    %v943 = vtanh.pop %v941
    %v944 = vadd.f32 %v942, 1.0
    %v945 = vadd.f32 %v943, 1.0
    %v946 = vmul.f32 %v930, %v944
    %v947 = vmul.f32 %v931, %v945
    %v948 = vld [vmem:[%s10] sm:$0xff]
    %v949 = vld [vmem:[%s10 + $0x8] sm:$0xff]
    %v950 = vld [vmem:[%s10 + $0x10] sm:$0xff]
    %v951 = vld [vmem:[%s10 + $0x18] sm:$0xff]
    %v952 = vld [vmem:[%s10 + $0x20] sm:$0xff]
    %v953 = vld [vmem:[%s10 + $0x28] sm:$0xff]
    %v954 = vld [vmem:[%s10 + $0x30] sm:$0xff]
    %v955 = vld [vmem:[%s10 + $0x38] sm:$0xff]
    %v956 = vld [vmem:[%s11] sm:$0x1]
    %v958 = vlaneseq
    %v959 = vshrl.u32 %v958, 7
    %v960 = vsub.s32 0, %v959
    %v961 = vrot.slane %v956, %v960
    %vm963 = vcmask 523264
    %v965 = vsel %vm963, %v946, 0
    %v968 = vsel %vm963, %v947, 0
    %970 = vmatprep.subr.mxu0 0.0
    %971 = vmatpush1.msra.mxu0 %v948
    %972 = vmatprep.subr.mxu0 0.0
    %973 = vmatpush1.msra.mxu0 %v949
    %974 = vmatprep.subr.mxu0 0.0
    %975 = vmatpush1.msra.mxu0 %v950
    %976 = vmatprep.subr.mxu0 0.0
    %977 = vmatpush1.msra.mxu0 %v951
    %978 = vmatprep.subr.mxu0 0.0
    %979 = vmatpush1.msra.mxu0 %v952
    %980 = vmatprep.subr.mxu0 0.0
    %981 = vmatpush1.msra.mxu0 %v953
    %982 = vmatprep.subr.mxu0 0.0
    %983 = vmatpush1.msra.mxu0 %v954
    %984 = vmatprep.subr.mxu0 0.0
    %985 = vmatpush1.msra.mxu0 %v955
    %986 = vmatprep.subr.mxu0 0.0
    %987 = vmatpush1.msra.mxu0 0.0
    %988 = vmatprep.subr.mxu0 0.0
    %989 = vmatpush1.msra.mxu0 0.0
    %990 = vmatprep.subr.mxu0 0.0
    %991 = vmatpush1.msra.mxu0 0.0
    %992 = vmatprep.subr.mxu0 0.0
    %993 = vmatpush1.msra.mxu0 0.0
    %994 = vmatprep.subr.mxu0 0.0
    %995 = vmatpush1.msra.mxu0 0.0
    %996 = vmatprep.subr.mxu0 0.0
    %997 = vmatpush1.msra.mxu0 0.0
    %998 = vmatprep.subr.mxu0 0.0
    %999 = vmatpush1.msra.mxu0 0.0
    %1000 = vmatprep.subr.mxu0 0.0
    %1001 = vmatpush1.msra.mxu0 0.0
    %1002 = vmatprep.subr.mxu0 0.0
    %1003 = vmatpush1.msra.mxu0 0.0
    %1004 = vmatprep.subr.mxu0 0.0
    %1005 = vmatpush1.msra.mxu0 0.0
    %1006 = vmatprep.subr.mxu0 0.0
    %1007 = vmatpush1.msra.mxu0 0.0
    %1008 = vmatprep.subr.mxu0 0.0
    %1009 = vmatpush1.msra.mxu0 0.0
    %1010 = vmatprep.subr.mxu0 0.0
    %1011 = vmatpush1.msra.mxu0 0.0
    %1012 = vmatprep.subr.mxu0 0.0
    %1013 = vmatpush1.msra.mxu0 0.0
    %1014 = vmatprep.subr.mxu0 0.0
    %1015 = vmatpush1.msra.mxu0 0.0
    %1016 = vmatprep.subr.mxu0 0.0
    %1017 = vmatpush1.msra.mxu0 0.0
    %1018 = vmatprep.subr.mxu0 0.0
    %1019 = vmatpush1.msra.mxu0 0.0
    %1020 = vmatprep.subr.mxu0 0.0
    %1021 = vmatpush1.msra.mxu0 0.0
    %1022 = vmatprep.subr.mxu0 0.0
    %1023 = vmatpush1.msra.mxu0 0.0
    %1024 = vmatprep.subr.mxu0 0.0
    %1025 = vmatpush1.msra.mxu0 0.0
    %1026 = vmatprep.subr.mxu0 0.0
    %1027 = vmatpush1.msra.mxu0 0.0
    %1028 = vmatprep.subr.mxu0 0.0
    %1029 = vmatpush1.msra.mxu0 0.0
    %1030 = vmatprep.subr.mxu0 0.0
    %1031 = vmatpush1.msra.mxu0 0.0
    %1032 = vmatprep.subr.mxu0 0.0
    %1033 = vmatpush1.msra.mxu0 0.0
    %1034 = vmatprep.mubr.f32.mxu0 0.0
    %1035 = vmatmul.mubr.f32.gmra.mrb[0].mxu0 %v965
    %v1036 = vpop.f32.mrb[0].mxu0
    %v1037 = vadd.f32 %v961, %v1036
    %v1038 = vpop.f32.mrb[0].mxu0
    %1039 = vmatprep.mubr.f32.mxu0 0.0
    %1040 = vmatmul.mubr.f32.gmra.mrb[0].mxu0 %v968
    %v1041 = vpop.f32.mrb[0].mxu0
    %v1042 = vadd.f32 %v961, %v1041
    %v1043 = vpop.f32.mrb[0].mxu0
    %1044 = vdwg.mxu0
    %v1045 = vadd.f32 %v836, %v1037
    %v1046 = vadd.f32 %v837, %v1042
    %v1047 = vld [vmem:[%s12] sm:$0x1]
    %v1048 = vld [vmem:[%s13] sm:$0x1]
    %v1049 = vsel %vm131, %v1045, 0.0
    %1050 = vadd.xlane.f32.xlu0 %v1049
    %v1051 = vpop.xlane.xlu0 %1050
    %v1052 = vsel %vm131, %v1046, 0.0
    %1053 = vadd.xlane.f32.xlu0 %v1052
    %v1054 = vpop.xlane.xlu0 %1053
    %v1055 = vmul.f32 %v1051, %v801
    %v1056 = vmul.f32 %v1054, %v801
    %v1057 = vsub.f32 %v1045, %v1055
    %v1058 = vsub.f32 %v1046, %v1056
    %v1059 = vmul.f32 %v1057, %v1057
    %v1060 = vmul.f32 %v1058, %v1058
    %v1061 = vsel %vm131, %v1059, 0.0
    %1062 = vadd.xlane.f32.xlu0 %v1061
    %v1063 = vpop.xlane.xlu0 %1062
    %v1064 = vsel %vm131, %v1060, 0.0
    %1065 = vadd.xlane.f32.xlu0 %v1064
    %v1066 = vpop.xlane.xlu0 %1065
    %v1067 = vmul.f32 %v1063, %v801
    %v1068 = vmul.f32 %v1066, %v801
    %v1069 = vadd.f32 %v1067, 1e-12
    %v1070 = vadd.f32 %v1068, 1e-12
    %v1071 = vrsqrt.pop %v1069
    %v1072 = vrsqrt.pop %v1070
    %v1073 = vmul.f32 %v1057, %v1071
    %v1074 = vmul.f32 %v1058, %v1072
    %v1076 = vlaneseq
    %v1077 = vshrl.u32 %v1076, 7
    %v1078 = vsub.s32 0, %v1077
    %v1079 = vrot.slane %v1047, %v1078
    %v1081 = vmul.f32 %v1073, %v1079
    %v1082 = vmul.f32 %v1074, %v1079
    %v1084 = vlaneseq
    %v1085 = vshrl.u32 %v1084, 7
    %v1086 = vsub.s32 0, %v1085
    %v1087 = vrot.slane %v1048, %v1086
    %v1089 = vadd.f32 %v1081, %v1087
    %v1090 = vadd.f32 %v1082, %v1087
    %1091 = vst.msk [vmem:[#allocation10] sm:$0xff] %vm131, %v1089
    %1092 = vst.msk [vmem:[#allocation10 + $0x8] sm:$0xff] %vm131, %v1090
    %v1094 = vrot.slane %v1090, 7
    %vm1096 = vcmask 1040384
    %v1097 = vsel %vm1096, %v1089, %v1094
    %v1098 = vld [vmem:[#allocation7] sm:$0xff]
    %v1099 = vld [vmem:[#allocation7 + $0x8] sm:$0xff]
    %v1100 = vld [vmem:[#allocation7 + $0x10] sm:$0xff]
    %v1101 = vld [vmem:[#allocation7 + $0x18] sm:$0xff]
    %v1102 = vld [vmem:[%s15] sm:$0x1]
    %v1104 = vlaneseq
    %v1105 = vshrl.u32 %v1104, 7
    %v1106 = vsub.s32 0, %v1105
    %v1107 = vrot.slane %v1102, %v1106
    %v1110 = vsel %vm131, %v1097, 0
    %1112 = vmatprep.subr.mxu0 0.0
    %1113 = vmatpush1.msra.mxu0 %v1098
    %1114 = vmatprep.subr.mxu0 0.0
    %1115 = vmatpush1.msra.mxu0 %v1099
    %1116 = vmatprep.subr.mxu0 0.0
    %1117 = vmatpush1.msra.mxu0 %v1100
    %1118 = vmatprep.subr.mxu0 0.0
    %1119 = vmatpush1.msra.mxu0 %v1101
    %1120 = vmatprep.subr.mxu0 0.0
    %1121 = vmatpush1.msra.mxu0 0.0
    %1122 = vmatprep.subr.mxu0 0.0
    %1123 = vmatpush1.msra.mxu0 0.0
    %1124 = vmatprep.subr.mxu0 0.0
    %1125 = vmatpush1.msra.mxu0 0.0
    %1126 = vmatprep.subr.mxu0 0.0
    %1127 = vmatpush1.msra.mxu0 0.0
    %1128 = vmatprep.subr.mxu0 0.0
    %1129 = vmatpush1.msra.mxu0 0.0
    %1130 = vmatprep.subr.mxu0 0.0
    %1131 = vmatpush1.msra.mxu0 0.0
    %1132 = vmatprep.subr.mxu0 0.0
    %1133 = vmatpush1.msra.mxu0 0.0
    %1134 = vmatprep.subr.mxu0 0.0
    %1135 = vmatpush1.msra.mxu0 0.0
    %1136 = vmatprep.subr.mxu0 0.0
    %1137 = vmatpush1.msra.mxu0 0.0
    %1138 = vmatprep.subr.mxu0 0.0
    %1139 = vmatpush1.msra.mxu0 0.0
    %1140 = vmatprep.subr.mxu0 0.0
    %1141 = vmatpush1.msra.mxu0 0.0
    %1142 = vmatprep.subr.mxu0 0.0
    %1143 = vmatpush1.msra.mxu0 0.0
    %1144 = vmatprep.subr.mxu0 0.0
    %1145 = vmatpush1.msra.mxu0 0.0
    %1146 = vmatprep.subr.mxu0 0.0
    %1147 = vmatpush1.msra.mxu0 0.0
    %1148 = vmatprep.subr.mxu0 0.0
    %1149 = vmatpush1.msra.mxu0 0.0
    %1150 = vmatprep.subr.mxu0 0.0
    %1151 = vmatpush1.msra.mxu0 0.0
    %1152 = vmatprep.subr.mxu0 0.0
    %1153 = vmatpush1.msra.mxu0 0.0
    %1154 = vmatprep.subr.mxu0 0.0
    %1155 = vmatpush1.msra.mxu0 0.0
    %1156 = vmatprep.subr.mxu0 0.0
    %1157 = vmatpush1.msra.mxu0 0.0
    %1158 = vmatprep.subr.mxu0 0.0
    %1159 = vmatpush1.msra.mxu0 0.0
    %1160 = vmatprep.subr.mxu0 0.0
    %1161 = vmatpush1.msra.mxu0 0.0
    %1162 = vmatprep.subr.mxu0 0.0
    %1163 = vmatpush1.msra.mxu0 0.0
    %1164 = vmatprep.subr.mxu0 0.0
    %1165 = vmatpush1.msra.mxu0 0.0
    %1166 = vmatprep.subr.mxu0 0.0
    %1167 = vmatpush1.msra.mxu0 0.0
    %1168 = vmatprep.subr.mxu0 0.0
    %1169 = vmatpush1.msra.mxu0 0.0
    %1170 = vmatprep.subr.mxu0 0.0
    %1171 = vmatpush1.msra.mxu0 0.0
    %1172 = vmatprep.subr.mxu0 0.0
    %1173 = vmatpush1.msra.mxu0 0.0
    %1174 = vmatprep.subr.mxu0 0.0
    %1175 = vmatpush1.msra.mxu0 0.0
    %1176 = vmatprep.mubr.f32.mxu0 0.0
    %1177 = vmatmul.mubr.f32.gmra.mrb[0].mxu0 %v1110
    %v1178 = vpop.f32.mrb[0].mxu0
    %v1179 = vadd.f32 %v1107, %v1178
    %v1180 = vpop.f32.mrb[0].mxu0
    %1181 = vdwg.mxu0
    %v1182 = vtanh.pop %v1179
    %v1183 = vld [vmem:[#allocation8] sm:$0xff]
    %v1184 = vld [vmem:[#allocation8 + $0x8] sm:$0xff]
    %v1185 = vld [vmem:[#allocation8 + $0x10] sm:$0xff]
    %v1186 = vld [vmem:[#allocation8 + $0x18] sm:$0xff]
    %v1188 = vsel %vm131, %v1182, 0
    %1190 = vmatprep.subr.mxu0 0.0
    %1191 = vmatpush1.msra.mxu0 %v1183
    %1192 = vmatprep.subr.mxu0 0.0
    %1193 = vmatpush1.msra.mxu0 %v1184
    %1194 = vmatprep.subr.mxu0 0.0
    %1195 = vmatpush1.msra.mxu0 %v1185
    %1196 = vmatprep.subr.mxu0 0.0
    %1197 = vmatpush1.msra.mxu0 %v1186
    %1198 = vmatprep.subr.mxu0 0.0
    %1199 = vmatpush1.msra.mxu0 0.0
    %1200 = vmatprep.subr.mxu0 0.0
    %1201 = vmatpush1.msra.mxu0 0.0
    %1202 = vmatprep.subr.mxu0 0.0
    %1203 = vmatpush1.msra.mxu0 0.0
    %1204 = vmatprep.subr.mxu0 0.0
    %1205 = vmatpush1.msra.mxu0 0.0
    %1206 = vmatprep.subr.mxu0 0.0
    %1207 = vmatpush1.msra.mxu0 0.0
    %1208 = vmatprep.subr.mxu0 0.0
    %1209 = vmatpush1.msra.mxu0 0.0
    %1210 = vmatprep.subr.mxu0 0.0
    %1211 = vmatpush1.msra.mxu0 0.0
    %1212 = vmatprep.subr.mxu0 0.0
    %1213 = vmatpush1.msra.mxu0 0.0
    %1214 = vmatprep.subr.mxu0 0.0
    %1215 = vmatpush1.msra.mxu0 0.0
    %1216 = vmatprep.subr.mxu0 0.0
    %1217 = vmatpush1.msra.mxu0 0.0
    %1218 = vmatprep.subr.mxu0 0.0
    %1219 = vmatpush1.msra.mxu0 0.0
    %1220 = vmatprep.subr.mxu0 0.0
    %1221 = vmatpush1.msra.mxu0 0.0
    %1222 = vmatprep.subr.mxu0 0.0
    %1223 = vmatpush1.msra.mxu0 0.0
    %1224 = vmatprep.subr.mxu0 0.0
    %1225 = vmatpush1.msra.mxu0 0.0
    %1226 = vmatprep.subr.mxu0 0.0
    %1227 = vmatpush1.msra.mxu0 0.0
    %1228 = vmatprep.subr.mxu0 0.0
    %1229 = vmatpush1.msra.mxu0 0.0
    %1230 = vmatprep.subr.mxu0 0.0
    %1231 = vmatpush1.msra.mxu0 0.0
    %1232 = vmatprep.subr.mxu0 0.0
    %1233 = vmatpush1.msra.mxu0 0.0
    %1234 = vmatprep.subr.mxu0 0.0
    %1235 = vmatpush1.msra.mxu0 0.0
    %1236 = vmatprep.subr.mxu0 0.0
    %1237 = vmatpush1.msra.mxu0 0.0
    %1238 = vmatprep.subr.mxu0 0.0
    %1239 = vmatpush1.msra.mxu0 0.0
    %1240 = vmatprep.subr.mxu0 0.0
    %1241 = vmatpush1.msra.mxu0 0.0
    %1242 = vmatprep.subr.mxu0 0.0
    %1243 = vmatpush1.msra.mxu0 0.0
    %1244 = vmatprep.subr.mxu0 0.0
    %1245 = vmatpush1.msra.mxu0 0.0
    %1246 = vmatprep.subr.mxu0 0.0
    %1247 = vmatpush1.msra.mxu0 0.0
    %1248 = vmatprep.subr.mxu0 0.0
    %1249 = vmatpush1.msra.mxu0 0.0
    %1250 = vmatprep.subr.mxu0 0.0
    %1251 = vmatpush1.msra.mxu0 0.0
    %1252 = vmatprep.subr.mxu0 0.0
    %1253 = vmatpush1.msra.mxu0 0.0
    %1254 = vmatprep.mubr.f32.mxu0 0.0
    %1255 = vmatmul.mubr.f32.gmra.mrb[0].mxu0 %v1188
    %v1256 = vpop.f32.mrb[0].mxu0
    %v1257 = vadd.f32 0.0, %v1256
    %v1258 = vpop.f32.mrb[0].mxu0
    %1259 = vdwg.mxu0
    %vm1260 = vcmask 254976
    %1261 = vst.msk [vmem:[#allocation11] sm:$0x3] %vm1260, %v1182
    %1262 = vst.msk [vmem:[#allocation13] sm:$0x3] %vm1260, %v1257
    // Predicated region
    $region86: #{tpu_custom_call.1} parent=1 // pred_check
      _
    $region87: #{tpu_custom_call.1} parent=1 // pred_check_branch
      %1264 = sbr.rel (0) target = $region89
    $region88: #{tpu_custom_call.1} parent=1 // pred_region
      %s1266 = ssub.s32 256, 256
      %1267 = vsyncadd [#allocation4], %s1266
      %s1268 = sshll.u32 [#allocation10], 4
      %s1269 = int_to_ptr.vmem [resolvable:$true] %s1268
      %1274 = dma.vmem_to_hbm [thread:$0]  %s1269, 256, %s17, [#allocation4], 128, 128, 8
    $region89: #{tpu_custom_call.1} parent=1 // pred_fallthru
      _
    // Predicated region
    $region90: #{tpu_custom_call.1} parent=1 // pred_check
      _
    $region91: #{tpu_custom_call.1} parent=1 // pred_check_branch
      %1276 = sbr.rel (0) target = $region93
    $region92: #{tpu_custom_call.1} parent=1 // pred_region
      %s1278 = ssub.s32 32, 32
      %1279 = vsyncadd [#allocation12], %s1278
      %s1281 = sshll.u32 [#allocation11], 4
      %s1282 = int_to_ptr.vmem [resolvable:$true] %s1281
      %1284 = dma.vmem_to_hbm [thread:$0]  %s1282, 32, %s18, [#allocation12]
    $region93: #{tpu_custom_call.1} parent=1 // pred_fallthru
      _
    // Predicated region
    $region94: #{tpu_custom_call.1} parent=1 // pred_check
      _
    $region95: #{tpu_custom_call.1} parent=1 // pred_check_branch
      %1286 = sbr.rel (0) target = $region97
    $region96: #{tpu_custom_call.1} parent=1 // pred_region
      %s1288 = ssub.s32 32, 32
      %1289 = vsyncadd [#allocation12], %s1288
      %s1291 = sshll.u32 [#allocation13], 4
      %s1292 = int_to_ptr.vmem [resolvable:$true] %s1291
      %1294 = dma.vmem_to_hbm [thread:$0]  %s1292, 32, %s19, [#allocation12]
    $region97: #{tpu_custom_call.1} parent=1 // pred_fallthru
      _
    // Predicated region
    $region98: #{tpu_custom_call.1} parent=1 // pred_check
      _
    $region99: #{tpu_custom_call.1} parent=1 // pred_check_branch
      %1296 = sbr.rel (0) target = $region101
    $region100: #{tpu_custom_call.1} parent=1 // pred_region
      %1297 = dma.done [#allocation4], 256
    $region101: #{tpu_custom_call.1} parent=1 // pred_fallthru
      _
    // Predicated region
    $region102: #{tpu_custom_call.1} parent=1 // pred_check
      _
    $region103: #{tpu_custom_call.1} parent=1 // pred_check_branch
      %1299 = sbr.rel (0) target = $region105
    $region104: #{tpu_custom_call.1} parent=1 // pred_region
      %1300 = dma.done [#allocation12], 32
    $region105: #{tpu_custom_call.1} parent=1 // pred_fallthru
      _
    // Predicated region
    $region106: #{tpu_custom_call.1} parent=1 // pred_check
      _
    $region107: #{tpu_custom_call.1} parent=1 // pred_check_branch
      %1302 = sbr.rel (0) target = $region109
    $region108: #{tpu_custom_call.1} parent=1 // pred_region
      %1303 = dma.done [#allocation12], 32
    $region109: #{tpu_custom_call.1} parent=1 // pred_fallthru
      _
    %1304 = vsyncpa [#allocation3], 1
    %1305 = vsyncpa [#allocation6], 1
    %1306 = vsyncpa [#allocation9], 1
    %1307 = vsyncpa [#allocation4], 1
    %1308 = vsyncpa [#allocation12], 1

</llo_original>
